<compile_context>
chip_gen: v5e
topology: v5e:2x2
jax: 0.10.0
libtpu: 0.0.40
codegen_flags: <defaults>
</compile_context>

<pallas_src>
import jax
import jax.numpy as jnp
from jax.experimental import pallas as pl
from jax.experimental.pallas import tpu as pltpu


# ----------------------------------------------------------------------------
# Shared math helpers (used both inside the Pallas kernel and in the pure-JAX
# reference so the depthwise-conv arithmetic is bit-for-bit the same ops).
# ----------------------------------------------------------------------------
def _shift_same_pad(x, offset):
    """Return y with y[..., t] = x[..., t + offset], zero-filled outside [0, W)."""
    if offset == 0:
        return x
    w = x.shape[-1]
    if offset > 0:
        pad = jnp.zeros(x.shape[:-1] + (offset,), x.dtype)
        return jnp.concatenate([x[..., offset:], pad], axis=-1)
    pad = jnp.zeros(x.shape[:-1] + (-offset,), x.dtype)
    return jnp.concatenate([pad, x[..., : w + offset]], axis=-1)


def _depthwise_conv_same(x, w, b_col, kernel_size):
    """Depthwise 1-D conv, 'same' zero padding.

    x: (..., S, W) float32, w: (S, K), b_col: (S, 1).
    """
    half = (kernel_size - 1) // 2
    acc = jnp.zeros(x.shape, jnp.float32) + b_col
    for k in range(kernel_size):
        offset = k - half
        acc = acc + w[:, k : k + 1] * _shift_same_pad(x, offset)
    return acc


# ----------------------------------------------------------------------------
# Pallas kernel
# ----------------------------------------------------------------------------
def _make_gnconv_kernel(order, dims, scale, bblk, ksize):
    n_pw = order - 1
    d0 = dims[0]

    def kernel(*refs):
        x_ref = refs[0]
        # Weights are tiny; load once per grid step, outside the batch loop.
        w_pwa = refs[1][...]
        b_pwa = refs[2][...]
        w_abc = refs[3][...]
        b_abc = refs[4][...]
        w_dw = refs[5][...]
        b_dw = refs[6][...]
        pw_w = [refs[7 + 2 * i][...] for i in range(n_pw)]
        pw_b = [refs[7 + 2 * i + 1][...] for i in range(n_pw)]
        w_out = refs[7 + 2 * n_pw][...]
        b_out = refs[8 + 2 * n_pw][...]
        o_ref = refs[9 + 2 * n_pw]

        for b in range(bblk):                                   # static unrolled batch loop
            x = x_ref[b]                                        # (C, Wp) f32
            # proj_in, already split into its pwa / abc halves (1x1 conv == matmul).
            pwa = jnp.dot(w_pwa, x, preferred_element_type=jnp.float32) + b_pwa
            abc = jnp.dot(w_abc, x, preferred_element_type=jnp.float32) + b_abc
            # Depthwise k=7 conv with zero 'same' padding, then * scale.
            dw = _depthwise_conv_same(abc, w_dw, b_dw, ksize) * scale
            # Recursive gating chain.
            cur = pwa * dw[0:d0, :]
            off = d0
            for i in range(n_pw):
                cur = jnp.dot(pw_w[i], cur, preferred_element_type=jnp.float32) + pw_b[i]
                cur = cur * dw[off : off + dims[i + 1], :]
                off += dims[i + 1]
            out = jnp.dot(w_out, cur, preferred_element_type=jnp.float32) + b_out
            o_ref[b] = out.astype(o_ref.dtype)

    return kernel


# ----------------------------------------------------------------------------
# Wrapper
# ----------------------------------------------------------------------------
def gnconv1d_pallas(x, params, *, order=5, scale=0.5, dw_kernel=7):
    """x: (B, C, W) float32.  params: dict of gnconv1d weights (see __main__)."""
    B, C, W = x.shape
    dims = [C // 2 ** i for i in range(order)]
    dims.reverse()
    d0, S = dims[0], sum(dims)
    assert d0 + S == 2 * C, "dim must be divisible by 2**(order-1)"

    # --- weight prep (one-time layout plumbing; kernel consumes (O, C) directly) ---
    w_in = params["proj_in_w"].reshape(2 * C, C)
    b_in = params["proj_in_b"].reshape(2 * C)
    w_pwa, w_abc = w_in[:d0], w_in[d0:]
    b_pwa, b_abc = b_in[:d0].reshape(d0, 1), b_in[d0:].reshape(S, 1)
    w_dw = params["dw_w"].reshape(S, dw_kernel)
    b_dw = params["dw_b"].reshape(S, 1)
    pw_ws = [params["pw_ws"][i].reshape(dims[i + 1], dims[i]) for i in range(order - 1)]
    pw_bs = [params["pw_bs"][i].reshape(dims[i + 1], 1) for i in range(order - 1)]
    w_out = params["proj_out_w"].reshape(C, C)
    b_out = params["proj_out_b"].reshape(C, 1)

    # --- lane-dense time axis: pad W up to a multiple of 128 (exact, see header) ---
    Wp = ((W + 127) // 128) * 128
    if Wp != W:
        x = jnp.pad(x, ((0, 0), (0, 0), (0, Wp - W)))

    # --- batch blocking: amortize per-step overhead, keep >=2 grid steps, fit VMEM ---
    # live bytes per batch ~= 2x (in + out block, double-buffered) + (2C + 2S) temps.
    bytes_per_batch = (4 * C + 2 * C + 2 * S) * Wp * 4
    vmem_budget = 24 * 1024 * 1024          # conservative: sized against v7x 64 MiB/TC
    bblk = 1
    for cand in range(1, B + 1):
        if B % cand:
            continue
        if cand * bytes_per_batch > vmem_budget:
            continue
        if B >= 2 and B // cand < 2:        # keep >=2 grid steps (v7x megacore balance)
            continue
        bblk = cand
    grid = (B // bblk,)

    weight_args = [w_pwa, b_pwa, w_abc, b_abc, w_dw, b_dw]
    for i in range(order - 1):
        weight_args += [pw_ws[i], pw_bs[i]]
    weight_args += [w_out, b_out]

    def _rep_spec(a):
        nd = a.ndim
        return pl.BlockSpec(a.shape, lambda b, _n=nd: (0,) * _n)

    in_specs = [pl.BlockSpec((bblk, C, Wp), lambda b: (b, 0, 0))] + [
        _rep_spec(a) for a in weight_args
    ]
    out_specs = pl.BlockSpec((bblk, C, Wp), lambda b: (b, 0, 0))

    # Advisory cost hint so XLA schedules surrounding ops sensibly.
    flops = 2 * B * Wp * (
        2 * C * C + C * C + S * dw_kernel
        + sum(dims[i + 1] * dims[i] for i in range(order - 1))
    )
    weight_bytes = sum(int(a.size) * 4 for a in weight_args)
    cost = pl.CostEstimate(
        flops=int(flops),
        transcendentals=0,
        bytes_accessed=int(2 * B * C * Wp * 4 + weight_bytes),
    )

    kernel = _make_gnconv_kernel(order, dims, float(scale), bblk, dw_kernel)

    out = pl.pallas_call(
        kernel,
        out_shape=jax.ShapeDtypeStruct((B, C, Wp), x.dtype),
        grid_spec=pltpu.PrefetchScalarGridSpec(
            num_scalar_prefetch=0,
            grid=grid,
            in_specs=in_specs,
            out_specs=out_specs,
        ),
        compiler_params=pltpu.CompilerParams(
            dimension_semantics=("parallel",),
            vmem_limit_bytes=48 * 1024 * 1024,   # fits v5e/v6e (128 MiB) and v7x (64 MiB)
        ),
        cost_estimate=cost,
    )(x, *weight_args)

    if Wp != W:
        out = out[..., :W]
    return out


# ----------------------------------------------------------------------------
# Pure-JAX reference of the PyTorch forward pass
# ----------------------------------------------------------------------------
def gnconv1d_ref(x, params, *, order=5, scale=0.5, dw_kernel=7):
    B, C, W = x.shape
    dims = [C // 2 ** i for i in range(order)]
    dims.reverse()
    d0, S = dims[0], sum(dims)

    w_in, b_in = params["proj_in_w"], params["proj_in_b"]
    fused = jnp.einsum("oc,bcw->bow", w_in, x) + b_in[None, :, None]
    pwa, abc = fused[:, :d0, :], fused[:, d0:, :]
    dw = _depthwise_conv_same(abc, params["dw_w"], params["dw_b"].reshape(S, 1),
                              dw_kernel) * scale
    cur = pwa * dw[:, :d0, :]
    off = d0
    for i in range(order - 1):
        cur = (jnp.einsum("oc,bcw->bow", params["pw_ws"][i], cur)
               + params["pw_bs"][i][None, :, None])
        cur = cur * dw[:, off : off + dims[i + 1], :]
        off += dims[i + 1]
    out = (jnp.einsum("oc,bcw->bow", params["proj_out_w"], cur)
           + params["proj_out_b"][None, :, None])
    return out


if __name__ == "__main__":
    DIM, ORDER, DW_K, SCALE = 32, 5, 7, 0.5
    B, W = 4, 128

    dims = [DIM // 2 ** i for i in range(ORDER)]
    dims.reverse()
    S = sum(dims)

    key = jax.random.PRNGKey(0)
    keys = iter(jax.random.split(key, 16))

    def nrm(shape, s=0.1):
        return jax.random.normal(next(keys), shape, dtype=jnp.float32) * s

    x = jax.random.normal(next(keys), (B, DIM, W), dtype=jnp.float32)
    params = {
        "proj_in_w": nrm((2 * DIM, DIM)),
        "proj_in_b": nrm((2 * DIM,)),
        "dw_w": nrm((S, DW_K)),
        "dw_b": nrm((S,)),
        "pw_ws": [nrm((dims[i + 1], dims[i])) for i in range(ORDER - 1)],
        "pw_bs": [nrm((dims[i + 1],)) for i in range(ORDER - 1)],
        "proj_out_w": nrm((DIM, DIM)),
        "proj_out_b": nrm((DIM,)),
    }

    out = gnconv1d_pallas(x, params, order=ORDER, scale=SCALE, dw_kernel=DW_K)
    out = jax.block_until_ready(out)

    ref = gnconv1d_ref(x, params, order=ORDER, scale=SCALE, dw_kernel=DW_K)
    assert out.shape == (B, DIM, W)
    assert jnp.allclose(out, ref, atol=1e-3, rtol=1e-3), float(jnp.max(jnp.abs(out - ref)))

    print("KERNEL_OK")
</pallas_src>

<mosaic_0001>
module attributes {stable_mosaic.version = 11 : i64} {
  func.func @kernel(%arg0: i32, %arg1: memref<2x32x128xf32, #tpu.memory_space<vmem>>, %arg2: memref<2x32xf32, #tpu.memory_space<vmem>>, %arg3: memref<2x1xf32, #tpu.memory_space<vmem>>, %arg4: memref<62x32xf32, #tpu.memory_space<vmem>>, %arg5: memref<62x1xf32, #tpu.memory_space<vmem>>, %arg6: memref<62x7xf32, #tpu.memory_space<vmem>>, %arg7: memref<62x1xf32, #tpu.memory_space<vmem>>, %arg8: memref<4x2xf32, #tpu.memory_space<vmem>>, %arg9: memref<4x1xf32, #tpu.memory_space<vmem>>, %arg10: memref<8x4xf32, #tpu.memory_space<vmem>>, %arg11: memref<8x1xf32, #tpu.memory_space<vmem>>, %arg12: memref<16x8xf32, #tpu.memory_space<vmem>>, %arg13: memref<16x1xf32, #tpu.memory_space<vmem>>, %arg14: memref<32x16xf32, #tpu.memory_space<vmem>>, %arg15: memref<32x1xf32, #tpu.memory_space<vmem>>, %arg16: memref<32x32xf32, #tpu.memory_space<vmem>>, %arg17: memref<32x1xf32, #tpu.memory_space<vmem>>, %arg18: memref<2x32x128xf32, #tpu.memory_space<vmem>>) attributes {dimension_semantics = [#tpu.dimension_semantics<parallel>], iteration_bounds = array<i64: 2>, scalar_prefetch = 0 : i64, scratch_operands = 0 : i64, tpu.core_type = #tpu.core_type<tc>, window_params = [{transform_indices = @transform_0, window_bounds = array<i64: 2, 32, 128>}, {pipeline_mode = #tpu.pipeline_mode<synchronous>, transform_indices = @transform_1, window_bounds = array<i64: 2, 32>}, {pipeline_mode = #tpu.pipeline_mode<synchronous>, transform_indices = @transform_2, window_bounds = array<i64: 2, 1>}, {pipeline_mode = #tpu.pipeline_mode<synchronous>, transform_indices = @transform_3, window_bounds = array<i64: 62, 32>}, {pipeline_mode = #tpu.pipeline_mode<synchronous>, transform_indices = @transform_4, window_bounds = array<i64: 62, 1>}, {pipeline_mode = #tpu.pipeline_mode<synchronous>, transform_indices = @transform_5, window_bounds = array<i64: 62, 7>}, {pipeline_mode = #tpu.pipeline_mode<synchronous>, transform_indices = @transform_6, window_bounds = array<i64: 62, 1>}, {pipeline_mode = #tpu.pipeline_mode<synchronous>, transform_indices = @transform_7, window_bounds = array<i64: 4, 2>}, {pipeline_mode = #tpu.pipeline_mode<synchronous>, transform_indices = @transform_8, window_bounds = array<i64: 4, 1>}, {pipeline_mode = #tpu.pipeline_mode<synchronous>, transform_indices = @transform_9, window_bounds = array<i64: 8, 4>}, {pipeline_mode = #tpu.pipeline_mode<synchronous>, transform_indices = @transform_10, window_bounds = array<i64: 8, 1>}, {pipeline_mode = #tpu.pipeline_mode<synchronous>, transform_indices = @transform_11, window_bounds = array<i64: 16, 8>}, {pipeline_mode = #tpu.pipeline_mode<synchronous>, transform_indices = @transform_12, window_bounds = array<i64: 16, 1>}, {pipeline_mode = #tpu.pipeline_mode<synchronous>, transform_indices = @transform_13, window_bounds = array<i64: 32, 16>}, {pipeline_mode = #tpu.pipeline_mode<synchronous>, transform_indices = @transform_14, window_bounds = array<i64: 32, 1>}, {pipeline_mode = #tpu.pipeline_mode<synchronous>, transform_indices = @transform_15, window_bounds = array<i64: 32, 32>}, {pipeline_mode = #tpu.pipeline_mode<synchronous>, transform_indices = @transform_16, window_bounds = array<i64: 32, 1>}, {transform_indices = @transform_17, window_bounds = array<i64: 2, 32, 128>}]} {
    %c0 = arith.constant 0 : index
    %c0_0 = arith.constant 0 : index
    %0 = vector.load %arg2[%c0, %c0_0] : memref<2x32xf32, #tpu.memory_space<vmem>>, vector<2x32xf32>
    %c0_1 = arith.constant 0 : index
    %c0_2 = arith.constant 0 : index
    %1 = vector.load %arg3[%c0_1, %c0_2] : memref<2x1xf32, #tpu.memory_space<vmem>>, vector<2x1xf32>
    %c0_3 = arith.constant 0 : index
    %c0_4 = arith.constant 0 : index
    %2 = vector.load %arg4[%c0_3, %c0_4] : memref<62x32xf32, #tpu.memory_space<vmem>>, vector<62x32xf32>
    %c0_5 = arith.constant 0 : index
    %c0_6 = arith.constant 0 : index
    %3 = vector.load %arg5[%c0_5, %c0_6] : memref<62x1xf32, #tpu.memory_space<vmem>>, vector<62x1xf32>
    %c0_7 = arith.constant 0 : index
    %c0_8 = arith.constant 0 : index
    %4 = vector.load %arg6[%c0_7, %c0_8] : memref<62x7xf32, #tpu.memory_space<vmem>>, vector<62x7xf32>
    %c0_9 = arith.constant 0 : index
    %c0_10 = arith.constant 0 : index
    %5 = vector.load %arg7[%c0_9, %c0_10] : memref<62x1xf32, #tpu.memory_space<vmem>>, vector<62x1xf32>
    %c0_11 = arith.constant 0 : index
    %c0_12 = arith.constant 0 : index
    %6 = vector.load %arg8[%c0_11, %c0_12] : memref<4x2xf32, #tpu.memory_space<vmem>>, vector<4x2xf32>
    %c0_13 = arith.constant 0 : index
    %c0_14 = arith.constant 0 : index
    %7 = vector.load %arg10[%c0_13, %c0_14] : memref<8x4xf32, #tpu.memory_space<vmem>>, vector<8x4xf32>
    %c0_15 = arith.constant 0 : index
    %c0_16 = arith.constant 0 : index
    %8 = vector.load %arg12[%c0_15, %c0_16] : memref<16x8xf32, #tpu.memory_space<vmem>>, vector<16x8xf32>
    %c0_17 = arith.constant 0 : index
    %c0_18 = arith.constant 0 : index
    %9 = vector.load %arg14[%c0_17, %c0_18] : memref<32x16xf32, #tpu.memory_space<vmem>>, vector<32x16xf32>
    %c0_19 = arith.constant 0 : index
    %c0_20 = arith.constant 0 : index
    %10 = vector.load %arg9[%c0_19, %c0_20] : memref<4x1xf32, #tpu.memory_space<vmem>>, vector<4x1xf32>
    %c0_21 = arith.constant 0 : index
    %c0_22 = arith.constant 0 : index
    %11 = vector.load %arg11[%c0_21, %c0_22] : memref<8x1xf32, #tpu.memory_space<vmem>>, vector<8x1xf32>
    %c0_23 = arith.constant 0 : index
    %c0_24 = arith.constant 0 : index
    %12 = vector.load %arg13[%c0_23, %c0_24] : memref<16x1xf32, #tpu.memory_space<vmem>>, vector<16x1xf32>
    %c0_25 = arith.constant 0 : index
    %c0_26 = arith.constant 0 : index
    %13 = vector.load %arg15[%c0_25, %c0_26] : memref<32x1xf32, #tpu.memory_space<vmem>>, vector<32x1xf32>
    %c0_27 = arith.constant 0 : index
    %c0_28 = arith.constant 0 : index
    %14 = vector.load %arg16[%c0_27, %c0_28] : memref<32x32xf32, #tpu.memory_space<vmem>>, vector<32x32xf32>
    %c0_29 = arith.constant 0 : index
    %c0_30 = arith.constant 0 : index
    %15 = vector.load %arg17[%c0_29, %c0_30] : memref<32x1xf32, #tpu.memory_space<vmem>>, vector<32x1xf32>
    %c0_31 = arith.constant 0 : index
    %c0_32 = arith.constant 0 : index
    %c0_33 = arith.constant 0 : index
    %16 = vector.load %arg1[%c0_31, %c0_32, %c0_33] : memref<2x32x128xf32, #tpu.memory_space<vmem>>, vector<1x32x128xf32>
    %17 = vector.shape_cast %16 : vector<1x32x128xf32> to vector<32x128xf32>
    %cst = arith.constant dense<0.000000e+00> : vector<2x128xf32>
    %18 = tpu.matmul %0, %17, %cst {dimension_numbers = #tpu.dot_dimension_numbers<[1], [0], [0], [1], [0, 0, 1, 1], [], []>} : vector<2x32xf32>, vector<32x128xf32>, vector<2x128xf32> -> vector<2x128xf32>
    %19 = vector.broadcast %1 : vector<2x1xf32> to vector<2x128xf32>
    %20 = arith.addf %18, %19 : vector<2x128xf32>
    %cst_34 = arith.constant dense<0.000000e+00> : vector<62x128xf32>
    %21 = tpu.matmul %2, %17, %cst_34 {dimension_numbers = #tpu.dot_dimension_numbers<[1], [0], [0], [1], [0, 0, 1, 1], [], []>} : vector<62x32xf32>, vector<32x128xf32>, vector<62x128xf32> -> vector<62x128xf32>
    %22 = vector.broadcast %3 : vector<62x1xf32> to vector<62x128xf32>
    %23 = arith.addf %21, %22 : vector<62x128xf32>
    %cst_35 = arith.constant 0.000000e+00 : f32
    %24 = vector.broadcast %cst_35 : f32 to vector<62x128xf32>
    %25 = vector.broadcast %5 : vector<62x1xf32> to vector<62x128xf32>
    %26 = arith.addf %24, %25 : vector<62x128xf32>
    %27 = vector.extract_strided_slice %4 {offsets = [0, 0], sizes = [62, 1], strides = [1, 1]} : vector<62x7xf32> to vector<62x1xf32>
    %cst_36 = arith.constant 0.000000e+00 : f32
    %28 = vector.broadcast %cst_36 : f32 to vector<62x3xf32>
    %29 = vector.extract_strided_slice %23 {offsets = [0, 0], sizes = [62, 125], strides = [1, 1]} : vector<62x128xf32> to vector<62x125xf32>
    %30 = tpu.concatenate %28, %29 in 1 : vector<62x3xf32>, vector<62x125xf32> -> vector<62x128xf32>
    %31 = vector.broadcast %27 : vector<62x1xf32> to vector<62x128xf32>
    %32 = arith.mulf %31, %30 : vector<62x128xf32>
    %33 = arith.addf %26, %32 : vector<62x128xf32>
    %34 = vector.extract_strided_slice %4 {offsets = [0, 1], sizes = [62, 1], strides = [1, 1]} : vector<62x7xf32> to vector<62x1xf32>
    %cst_37 = arith.constant 0.000000e+00 : f32
    %35 = vector.broadcast %cst_37 : f32 to vector<62x2xf32>
    %36 = vector.extract_strided_slice %23 {offsets = [0, 0], sizes = [62, 126], strides = [1, 1]} : vector<62x128xf32> to vector<62x126xf32>
    %37 = tpu.concatenate %35, %36 in 1 : vector<62x2xf32>, vector<62x126xf32> -> vector<62x128xf32>
    %38 = vector.broadcast %34 : vector<62x1xf32> to vector<62x128xf32>
    %39 = arith.mulf %38, %37 : vector<62x128xf32>
    %40 = arith.addf %33, %39 : vector<62x128xf32>
    %41 = vector.extract_strided_slice %4 {offsets = [0, 2], sizes = [62, 1], strides = [1, 1]} : vector<62x7xf32> to vector<62x1xf32>
    %cst_38 = arith.constant 0.000000e+00 : f32
    %42 = vector.broadcast %cst_38 : f32 to vector<62x1xf32>
    %43 = vector.extract_strided_slice %23 {offsets = [0, 0], sizes = [62, 127], strides = [1, 1]} : vector<62x128xf32> to vector<62x127xf32>
    %44 = tpu.concatenate %42, %43 in 1 : vector<62x1xf32>, vector<62x127xf32> -> vector<62x128xf32>
    %45 = vector.broadcast %41 : vector<62x1xf32> to vector<62x128xf32>
    %46 = arith.mulf %45, %44 : vector<62x128xf32>
    %47 = arith.addf %40, %46 : vector<62x128xf32>
    %48 = vector.extract_strided_slice %4 {offsets = [0, 3], sizes = [62, 1], strides = [1, 1]} : vector<62x7xf32> to vector<62x1xf32>
    %49 = vector.broadcast %48 : vector<62x1xf32> to vector<62x128xf32>
    %50 = arith.mulf %49, %23 : vector<62x128xf32>
    %51 = arith.addf %47, %50 : vector<62x128xf32>
    %52 = vector.extract_strided_slice %4 {offsets = [0, 4], sizes = [62, 1], strides = [1, 1]} : vector<62x7xf32> to vector<62x1xf32>
    %cst_39 = arith.constant 0.000000e+00 : f32
    %53 = vector.broadcast %cst_39 : f32 to vector<62x1xf32>
    %54 = vector.extract_strided_slice %23 {offsets = [0, 1], sizes = [62, 127], strides = [1, 1]} : vector<62x128xf32> to vector<62x127xf32>
    %55 = tpu.concatenate %54, %53 in 1 : vector<62x127xf32>, vector<62x1xf32> -> vector<62x128xf32>
    %56 = vector.broadcast %52 : vector<62x1xf32> to vector<62x128xf32>
    %57 = arith.mulf %56, %55 : vector<62x128xf32>
    %58 = arith.addf %51, %57 : vector<62x128xf32>
    %59 = vector.extract_strided_slice %4 {offsets = [0, 5], sizes = [62, 1], strides = [1, 1]} : vector<62x7xf32> to vector<62x1xf32>
    %cst_40 = arith.constant 0.000000e+00 : f32
    %60 = vector.broadcast %cst_40 : f32 to vector<62x2xf32>
    %61 = vector.extract_strided_slice %23 {offsets = [0, 2], sizes = [62, 126], strides = [1, 1]} : vector<62x128xf32> to vector<62x126xf32>
    %62 = tpu.concatenate %61, %60 in 1 : vector<62x126xf32>, vector<62x2xf32> -> vector<62x128xf32>
    %63 = vector.broadcast %59 : vector<62x1xf32> to vector<62x128xf32>
    %64 = arith.mulf %63, %62 : vector<62x128xf32>
    %65 = arith.addf %58, %64 : vector<62x128xf32>
    %66 = vector.extract_strided_slice %4 {offsets = [0, 6], sizes = [62, 1], strides = [1, 1]} : vector<62x7xf32> to vector<62x1xf32>
    %cst_41 = arith.constant 0.000000e+00 : f32
    %67 = vector.broadcast %cst_41 : f32 to vector<62x3xf32>
    %68 = vector.extract_strided_slice %23 {offsets = [0, 3], sizes = [62, 125], strides = [1, 1]} : vector<62x128xf32> to vector<62x125xf32>
    %69 = tpu.concatenate %68, %67 in 1 : vector<62x125xf32>, vector<62x3xf32> -> vector<62x128xf32>
    %70 = vector.broadcast %66 : vector<62x1xf32> to vector<62x128xf32>
    %71 = arith.mulf %70, %69 : vector<62x128xf32>
    %72 = arith.addf %65, %71 : vector<62x128xf32>
    %cst_42 = arith.constant 5.000000e-01 : f32
    %73 = vector.broadcast %cst_42 : f32 to vector<62x128xf32>
    %74 = arith.mulf %72, %73 : vector<62x128xf32>
    %75 = vector.extract_strided_slice %74 {offsets = [0, 0], sizes = [2, 128], strides = [1, 1]} : vector<62x128xf32> to vector<2x128xf32>
    %76 = arith.mulf %20, %75 : vector<2x128xf32>
    %cst_43 = arith.constant dense<0.000000e+00> : vector<4x128xf32>
    %77 = tpu.matmul %6, %76, %cst_43 {dimension_numbers = #tpu.dot_dimension_numbers<[1], [0], [0], [1], [0, 0, 1, 1], [], []>} : vector<4x2xf32>, vector<2x128xf32>, vector<4x128xf32> -> vector<4x128xf32>
    %78 = vector.broadcast %10 : vector<4x1xf32> to vector<4x128xf32>
    %79 = arith.addf %77, %78 : vector<4x128xf32>
    %80 = vector.extract_strided_slice %74 {offsets = [2, 0], sizes = [4, 128], strides = [1, 1]} : vector<62x128xf32> to vector<4x128xf32>
    %81 = arith.mulf %79, %80 : vector<4x128xf32>
    %cst_44 = arith.constant dense<0.000000e+00> : vector<8x128xf32>
    %82 = tpu.matmul %7, %81, %cst_44 {dimension_numbers = #tpu.dot_dimension_numbers<[1], [0], [0], [1], [0, 0, 1, 1], [], []>} : vector<8x4xf32>, vector<4x128xf32>, vector<8x128xf32> -> vector<8x128xf32>
    %83 = vector.broadcast %11 : vector<8x1xf32> to vector<8x128xf32>
    %84 = arith.addf %82, %83 : vector<8x128xf32>
    %85 = vector.extract_strided_slice %74 {offsets = [6, 0], sizes = [8, 128], strides = [1, 1]} : vector<62x128xf32> to vector<8x128xf32>
    %86 = arith.mulf %84, %85 : vector<8x128xf32>
    %cst_45 = arith.constant dense<0.000000e+00> : vector<16x128xf32>
    %87 = tpu.matmul %8, %86, %cst_45 {dimension_numbers = #tpu.dot_dimension_numbers<[1], [0], [0], [1], [0, 0, 1, 1], [], []>} : vector<16x8xf32>, vector<8x128xf32>, vector<16x128xf32> -> vector<16x128xf32>
    %88 = vector.broadcast %12 : vector<16x1xf32> to vector<16x128xf32>
    %89 = arith.addf %87, %88 : vector<16x128xf32>
    %90 = vector.extract_strided_slice %74 {offsets = [14, 0], sizes = [16, 128], strides = [1, 1]} : vector<62x128xf32> to vector<16x128xf32>
    %91 = arith.mulf %89, %90 : vector<16x128xf32>
    %cst_46 = arith.constant dense<0.000000e+00> : vector<32x128xf32>
    %92 = tpu.matmul %9, %91, %cst_46 {dimension_numbers = #tpu.dot_dimension_numbers<[1], [0], [0], [1], [0, 0, 1, 1], [], []>} : vector<32x16xf32>, vector<16x128xf32>, vector<32x128xf32> -> vector<32x128xf32>
    %93 = vector.broadcast %13 : vector<32x1xf32> to vector<32x128xf32>
    %94 = arith.addf %92, %93 : vector<32x128xf32>
    %95 = vector.extract_strided_slice %74 {offsets = [30, 0], sizes = [32, 128], strides = [1, 1]} : vector<62x128xf32> to vector<32x128xf32>
    %96 = arith.mulf %94, %95 : vector<32x128xf32>
    %cst_47 = arith.constant dense<0.000000e+00> : vector<32x128xf32>
    %97 = tpu.matmul %14, %96, %cst_47 {dimension_numbers = #tpu.dot_dimension_numbers<[1], [0], [0], [1], [0, 0, 1, 1], [], []>} : vector<32x32xf32>, vector<32x128xf32>, vector<32x128xf32> -> vector<32x128xf32>
    %98 = vector.broadcast %15 : vector<32x1xf32> to vector<32x128xf32>
    %99 = arith.addf %97, %98 : vector<32x128xf32>
    %c0_48 = arith.constant 0 : index
    %c0_49 = arith.constant 0 : index
    %c0_50 = arith.constant 0 : index
    %100 = vector.load %arg18[%c0_48, %c0_49, %c0_50] : memref<2x32x128xf32, #tpu.memory_space<vmem>>, vector<1x32x128xf32>
    %101 = vector.shape_cast %100 : vector<1x32x128xf32> to vector<32x128xf32>
    %102 = vector.shape_cast %99 : vector<32x128xf32> to vector<1x32x128xf32>
    tpu.vector_store %arg18[%c0_48, %c0_49, %c0_50], %102 {strides = array<i32>} : memref<2x32x128xf32, #tpu.memory_space<vmem>>, vector<1x32x128xf32>,
    %c1 = arith.constant 1 : index
    %c0_51 = arith.constant 0 : index
    %c0_52 = arith.constant 0 : index
    %103 = vector.load %arg1[%c1, %c0_51, %c0_52] : memref<2x32x128xf32, #tpu.memory_space<vmem>>, vector<1x32x128xf32>
    %104 = vector.shape_cast %103 : vector<1x32x128xf32> to vector<32x128xf32>
    %cst_53 = arith.constant dense<0.000000e+00> : vector<2x128xf32>
    %105 = tpu.matmul %0, %104, %cst_53 {dimension_numbers = #tpu.dot_dimension_numbers<[1], [0], [0], [1], [0, 0, 1, 1], [], []>} : vector<2x32xf32>, vector<32x128xf32>, vector<2x128xf32> -> vector<2x128xf32>
    %106 = vector.broadcast %1 : vector<2x1xf32> to vector<2x128xf32>
    %107 = arith.addf %105, %106 : vector<2x128xf32>
    %cst_54 = arith.constant dense<0.000000e+00> : vector<62x128xf32>
    %108 = tpu.matmul %2, %104, %cst_54 {dimension_numbers = #tpu.dot_dimension_numbers<[1], [0], [0], [1], [0, 0, 1, 1], [], []>} : vector<62x32xf32>, vector<32x128xf32>, vector<62x128xf32> -> vector<62x128xf32>
    %109 = vector.broadcast %3 : vector<62x1xf32> to vector<62x128xf32>
    %110 = arith.addf %108, %109 : vector<62x128xf32>
    %cst_55 = arith.constant 0.000000e+00 : f32
    %111 = vector.broadcast %cst_55 : f32 to vector<62x128xf32>
    %112 = vector.broadcast %5 : vector<62x1xf32> to vector<62x128xf32>
    %113 = arith.addf %111, %112 : vector<62x128xf32>
    %114 = vector.extract_strided_slice %4 {offsets = [0, 0], sizes = [62, 1], strides = [1, 1]} : vector<62x7xf32> to vector<62x1xf32>
    %cst_56 = arith.constant 0.000000e+00 : f32
    %115 = vector.broadcast %cst_56 : f32 to vector<62x3xf32>
    %116 = vector.extract_strided_slice %110 {offsets = [0, 0], sizes = [62, 125], strides = [1, 1]} : vector<62x128xf32> to vector<62x125xf32>
    %117 = tpu.concatenate %115, %116 in 1 : vector<62x3xf32>, vector<62x125xf32> -> vector<62x128xf32>
    %118 = vector.broadcast %114 : vector<62x1xf32> to vector<62x128xf32>
    %119 = arith.mulf %118, %117 : vector<62x128xf32>
    %120 = arith.addf %113, %119 : vector<62x128xf32>
    %121 = vector.extract_strided_slice %4 {offsets = [0, 1], sizes = [62, 1], strides = [1, 1]} : vector<62x7xf32> to vector<62x1xf32>
    %cst_57 = arith.constant 0.000000e+00 : f32
    %122 = vector.broadcast %cst_57 : f32 to vector<62x2xf32>
    %123 = vector.extract_strided_slice %110 {offsets = [0, 0], sizes = [62, 126], strides = [1, 1]} : vector<62x128xf32> to vector<62x126xf32>
    %124 = tpu.concatenate %122, %123 in 1 : vector<62x2xf32>, vector<62x126xf32> -> vector<62x128xf32>
    %125 = vector.broadcast %121 : vector<62x1xf32> to vector<62x128xf32>
    %126 = arith.mulf %125, %124 : vector<62x128xf32>
    %127 = arith.addf %120, %126 : vector<62x128xf32>
    %128 = vector.extract_strided_slice %4 {offsets = [0, 2], sizes = [62, 1], strides = [1, 1]} : vector<62x7xf32> to vector<62x1xf32>
    %cst_58 = arith.constant 0.000000e+00 : f32
    %129 = vector.broadcast %cst_58 : f32 to vector<62x1xf32>
    %130 = vector.extract_strided_slice %110 {offsets = [0, 0], sizes = [62, 127], strides = [1, 1]} : vector<62x128xf32> to vector<62x127xf32>
    %131 = tpu.concatenate %129, %130 in 1 : vector<62x1xf32>, vector<62x127xf32> -> vector<62x128xf32>
    %132 = vector.broadcast %128 : vector<62x1xf32> to vector<62x128xf32>
    %133 = arith.mulf %132, %131 : vector<62x128xf32>
    %134 = arith.addf %127, %133 : vector<62x128xf32>
    %135 = vector.extract_strided_slice %4 {offsets = [0, 3], sizes = [62, 1], strides = [1, 1]} : vector<62x7xf32> to vector<62x1xf32>
    %136 = vector.broadcast %135 : vector<62x1xf32> to vector<62x128xf32>
    %137 = arith.mulf %136, %110 : vector<62x128xf32>
    %138 = arith.addf %134, %137 : vector<62x128xf32>
    %139 = vector.extract_strided_slice %4 {offsets = [0, 4], sizes = [62, 1], strides = [1, 1]} : vector<62x7xf32> to vector<62x1xf32>
    %cst_59 = arith.constant 0.000000e+00 : f32
    %140 = vector.broadcast %cst_59 : f32 to vector<62x1xf32>
    %141 = vector.extract_strided_slice %110 {offsets = [0, 1], sizes = [62, 127], strides = [1, 1]} : vector<62x128xf32> to vector<62x127xf32>
    %142 = tpu.concatenate %141, %140 in 1 : vector<62x127xf32>, vector<62x1xf32> -> vector<62x128xf32>
    %143 = vector.broadcast %139 : vector<62x1xf32> to vector<62x128xf32>
    %144 = arith.mulf %143, %142 : vector<62x128xf32>
    %145 = arith.addf %138, %144 : vector<62x128xf32>
    %146 = vector.extract_strided_slice %4 {offsets = [0, 5], sizes = [62, 1], strides = [1, 1]} : vector<62x7xf32> to vector<62x1xf32>
    %cst_60 = arith.constant 0.000000e+00 : f32
    %147 = vector.broadcast %cst_60 : f32 to vector<62x2xf32>
    %148 = vector.extract_strided_slice %110 {offsets = [0, 2], sizes = [62, 126], strides = [1, 1]} : vector<62x128xf32> to vector<62x126xf32>
    %149 = tpu.concatenate %148, %147 in 1 : vector<62x126xf32>, vector<62x2xf32> -> vector<62x128xf32>
    %150 = vector.broadcast %146 : vector<62x1xf32> to vector<62x128xf32>
    %151 = arith.mulf %150, %149 : vector<62x128xf32>
    %152 = arith.addf %145, %151 : vector<62x128xf32>
    %153 = vector.extract_strided_slice %4 {offsets = [0, 6], sizes = [62, 1], strides = [1, 1]} : vector<62x7xf32> to vector<62x1xf32>
    %cst_61 = arith.constant 0.000000e+00 : f32
    %154 = vector.broadcast %cst_61 : f32 to vector<62x3xf32>
    %155 = vector.extract_strided_slice %110 {offsets = [0, 3], sizes = [62, 125], strides = [1, 1]} : vector<62x128xf32> to vector<62x125xf32>
    %156 = tpu.concatenate %155, %154 in 1 : vector<62x125xf32>, vector<62x3xf32> -> vector<62x128xf32>
    %157 = vector.broadcast %153 : vector<62x1xf32> to vector<62x128xf32>
    %158 = arith.mulf %157, %156 : vector<62x128xf32>
    %159 = arith.addf %152, %158 : vector<62x128xf32>
    %cst_62 = arith.constant 5.000000e-01 : f32
    %160 = vector.broadcast %cst_62 : f32 to vector<62x128xf32>
    %161 = arith.mulf %159, %160 : vector<62x128xf32>
    %162 = vector.extract_strided_slice %161 {offsets = [0, 0], sizes = [2, 128], strides = [1, 1]} : vector<62x128xf32> to vector<2x128xf32>
    %163 = arith.mulf %107, %162 : vector<2x128xf32>
    %cst_63 = arith.constant dense<0.000000e+00> : vector<4x128xf32>
    %164 = tpu.matmul %6, %163, %cst_63 {dimension_numbers = #tpu.dot_dimension_numbers<[1], [0], [0], [1], [0, 0, 1, 1], [], []>} : vector<4x2xf32>, vector<2x128xf32>, vector<4x128xf32> -> vector<4x128xf32>
    %165 = vector.broadcast %10 : vector<4x1xf32> to vector<4x128xf32>
    %166 = arith.addf %164, %165 : vector<4x128xf32>
    %167 = vector.extract_strided_slice %161 {offsets = [2, 0], sizes = [4, 128], strides = [1, 1]} : vector<62x128xf32> to vector<4x128xf32>
    %168 = arith.mulf %166, %167 : vector<4x128xf32>
    %cst_64 = arith.constant dense<0.000000e+00> : vector<8x128xf32>
    %169 = tpu.matmul %7, %168, %cst_64 {dimension_numbers = #tpu.dot_dimension_numbers<[1], [0], [0], [1], [0, 0, 1, 1], [], []>} : vector<8x4xf32>, vector<4x128xf32>, vector<8x128xf32> -> vector<8x128xf32>
    %170 = vector.broadcast %11 : vector<8x1xf32> to vector<8x128xf32>
    %171 = arith.addf %169, %170 : vector<8x128xf32>
    %172 = vector.extract_strided_slice %161 {offsets = [6, 0], sizes = [8, 128], strides = [1, 1]} : vector<62x128xf32> to vector<8x128xf32>
    %173 = arith.mulf %171, %172 : vector<8x128xf32>
    %cst_65 = arith.constant dense<0.000000e+00> : vector<16x128xf32>
    %174 = tpu.matmul %8, %173, %cst_65 {dimension_numbers = #tpu.dot_dimension_numbers<[1], [0], [0], [1], [0, 0, 1, 1], [], []>} : vector<16x8xf32>, vector<8x128xf32>, vector<16x128xf32> -> vector<16x128xf32>
    %175 = vector.broadcast %12 : vector<16x1xf32> to vector<16x128xf32>
    %176 = arith.addf %174, %175 : vector<16x128xf32>
    %177 = vector.extract_strided_slice %161 {offsets = [14, 0], sizes = [16, 128], strides = [1, 1]} : vector<62x128xf32> to vector<16x128xf32>
    %178 = arith.mulf %176, %177 : vector<16x128xf32>
    %cst_66 = arith.constant dense<0.000000e+00> : vector<32x128xf32>
    %179 = tpu.matmul %9, %178, %cst_66 {dimension_numbers = #tpu.dot_dimension_numbers<[1], [0], [0], [1], [0, 0, 1, 1], [], []>} : vector<32x16xf32>, vector<16x128xf32>, vector<32x128xf32> -> vector<32x128xf32>
    %180 = vector.broadcast %13 : vector<32x1xf32> to vector<32x128xf32>
    %181 = arith.addf %179, %180 : vector<32x128xf32>
    %182 = vector.extract_strided_slice %161 {offsets = [30, 0], sizes = [32, 128], strides = [1, 1]} : vector<62x128xf32> to vector<32x128xf32>
    %183 = arith.mulf %181, %182 : vector<32x128xf32>
    %cst_67 = arith.constant dense<0.000000e+00> : vector<32x128xf32>
    %184 = tpu.matmul %14, %183, %cst_67 {dimension_numbers = #tpu.dot_dimension_numbers<[1], [0], [0], [1], [0, 0, 1, 1], [], []>} : vector<32x32xf32>, vector<32x128xf32>, vector<32x128xf32> -> vector<32x128xf32>
    %185 = vector.broadcast %15 : vector<32x1xf32> to vector<32x128xf32>
    %186 = arith.addf %184, %185 : vector<32x128xf32>
    %c1_68 = arith.constant 1 : index
    %c0_69 = arith.constant 0 : index
    %c0_70 = arith.constant 0 : index
    %187 = vector.load %arg18[%c1_68, %c0_69, %c0_70] : memref<2x32x128xf32, #tpu.memory_space<vmem>>, vector<1x32x128xf32>
    %188 = vector.shape_cast %187 : vector<1x32x128xf32> to vector<32x128xf32>
    %189 = vector.shape_cast %186 : vector<32x128xf32> to vector<1x32x128xf32>
    tpu.vector_store %arg18[%c1_68, %c0_69, %c0_70], %189 {strides = array<i32>} : memref<2x32x128xf32, #tpu.memory_space<vmem>>, vector<1x32x128xf32>,
    return
  }
  func.func @transform_0(%arg0: i32) -> (i32, i32, i32) {
    %c0_i32 = arith.constant 0 : i32
    %c0_i32_0 = arith.constant 0 : i32
    %c0_i32_1 = arith.constant 0 : i32
    return %arg0, %c0_i32, %c0_i32_0 : i32, i32, i32
  }
  func.func @transform_1(%arg0: i32) -> (i32, i32) {
    %c0_i32 = arith.constant 0 : i32
    %c0_i32_0 = arith.constant 0 : i32
    %c0_i32_1 = arith.constant 0 : i32
    return %c0_i32, %c0_i32_0 : i32, i32
  }
  func.func @transform_2(%arg0: i32) -> (i32, i32) {
    %c0_i32 = arith.constant 0 : i32
    %c0_i32_0 = arith.constant 0 : i32
    %c0_i32_1 = arith.constant 0 : i32
    return %c0_i32, %c0_i32_0 : i32, i32
  }
  func.func @transform_3(%arg0: i32) -> (i32, i32) {
    %c0_i32 = arith.constant 0 : i32
    %c0_i32_0 = arith.constant 0 : i32
    %c0_i32_1 = arith.constant 0 : i32
    return %c0_i32, %c0_i32_0 : i32, i32
  }
  func.func @transform_4(%arg0: i32) -> (i32, i32) {
    %c0_i32 = arith.constant 0 : i32
    %c0_i32_0 = arith.constant 0 : i32
    %c0_i32_1 = arith.constant 0 : i32
    return %c0_i32, %c0_i32_0 : i32, i32
  }
  func.func @transform_5(%arg0: i32) -> (i32, i32) {
    %c0_i32 = arith.constant 0 : i32
    %c0_i32_0 = arith.constant 0 : i32
    %c0_i32_1 = arith.constant 0 : i32
    return %c0_i32, %c0_i32_0 : i32, i32
  }
  func.func @transform_6(%arg0: i32) -> (i32, i32) {
    %c0_i32 = arith.constant 0 : i32
    %c0_i32_0 = arith.constant 0 : i32
    %c0_i32_1 = arith.constant 0 : i32
    return %c0_i32, %c0_i32_0 : i32, i32
  }
  func.func @transform_7(%arg0: i32) -> (i32, i32) {
    %c0_i32 = arith.constant 0 : i32
    %c0_i32_0 = arith.constant 0 : i32
    %c0_i32_1 = arith.constant 0 : i32
    return %c0_i32, %c0_i32_0 : i32, i32
  }
  func.func @transform_8(%arg0: i32) -> (i32, i32) {
    %c0_i32 = arith.constant 0 : i32
    %c0_i32_0 = arith.constant 0 : i32
    %c0_i32_1 = arith.constant 0 : i32
    return %c0_i32, %c0_i32_0 : i32, i32
  }
  func.func @transform_9(%arg0: i32) -> (i32, i32) {
    %c0_i32 = arith.constant 0 : i32
    %c0_i32_0 = arith.constant 0 : i32
    %c0_i32_1 = arith.constant 0 : i32
    return %c0_i32, %c0_i32_0 : i32, i32
  }
  func.func @transform_10(%arg0: i32) -> (i32, i32) {
    %c0_i32 = arith.constant 0 : i32
    %c0_i32_0 = arith.constant 0 : i32
    %c0_i32_1 = arith.constant 0 : i32
    return %c0_i32, %c0_i32_0 : i32, i32
  }
  func.func @transform_11(%arg0: i32) -> (i32, i32) {
    %c0_i32 = arith.constant 0 : i32
    %c0_i32_0 = arith.constant 0 : i32
    %c0_i32_1 = arith.constant 0 : i32
    return %c0_i32, %c0_i32_0 : i32, i32
  }
  func.func @transform_12(%arg0: i32) -> (i32, i32) {
    %c0_i32 = arith.constant 0 : i32
    %c0_i32_0 = arith.constant 0 : i32
    %c0_i32_1 = arith.constant 0 : i32
    return %c0_i32, %c0_i32_0 : i32, i32
  }
  func.func @transform_13(%arg0: i32) -> (i32, i32) {
    %c0_i32 = arith.constant 0 : i32
    %c0_i32_0 = arith.constant 0 : i32
    %c0_i32_1 = arith.constant 0 : i32
    return %c0_i32, %c0_i32_0 : i32, i32
  }
  func.func @transform_14(%arg0: i32) -> (i32, i32) {
    %c0_i32 = arith.constant 0 : i32
    %c0_i32_0 = arith.constant 0 : i32
    %c0_i32_1 = arith.constant 0 : i32
    return %c0_i32, %c0_i32_0 : i32, i32
  }
  func.func @transform_15(%arg0: i32) -> (i32, i32) {
    %c0_i32 = arith.constant 0 : i32
    %c0_i32_0 = arith.constant 0 : i32
    %c0_i32_1 = arith.constant 0 : i32
    return %c0_i32, %c0_i32_0 : i32, i32
  }
  func.func @transform_16(%arg0: i32) -> (i32, i32) {
    %c0_i32 = arith.constant 0 : i32
    %c0_i32_0 = arith.constant 0 : i32
    %c0_i32_1 = arith.constant 0 : i32
    return %c0_i32, %c0_i32_0 : i32, i32
  }
  func.func @transform_17(%arg0: i32) -> (i32, i32, i32) {
    %c0_i32 = arith.constant 0 : i32
    %c0_i32_0 = arith.constant 0 : i32
    %c0_i32_1 = arith.constant 0 : i32
    return %arg0, %c0_i32, %c0_i32_0 : i32, i32, i32
  }
}

</mosaic_0001>

<llo_original>
// kernel: tpu_custom_call.1
$region0: #{tpu_custom_call.1}
  #allocation0 [shape = 'u32[]', space=smem, size = 0x4, offset = 0x4, fixed_abs, tag = 'smem constant byte address 0x4 - core index']
  #allocation1 [shape = 'u32[72,128]{1,0:T(1,128)}', space=vmem, size = 0x9000, scoped, tag = 'internal scratch']
  %s0 = inlined_call_operand.vmem [shape: f32[4,32,128], index: 0, kind: input, shape index: {}]
  %s1 = inlined_call_operand.vmem [shape: f32[2,32], index: 1, kind: input, shape index: {}]
  %s2 = inlined_call_operand.vmem [shape: f32[2,1], index: 2, kind: input, shape index: {}]
  %s3 = inlined_call_operand.vmem [shape: f32[62,32], index: 3, kind: input, shape index: {}]
  %s4 = inlined_call_operand.vmem [shape: f32[62,1], index: 4, kind: input, shape index: {}]
  %s5 = inlined_call_operand.vmem [shape: f32[62,7], index: 5, kind: input, shape index: {}]
  %s6 = inlined_call_operand.vmem [shape: f32[62,1], index: 6, kind: input, shape index: {}]
  %s7 = inlined_call_operand.vmem [shape: f32[4,2], index: 7, kind: input, shape index: {}]
  %s8 = inlined_call_operand.vmem [shape: f32[4,1], index: 8, kind: input, shape index: {}]
  %s9 = inlined_call_operand.vmem [shape: f32[8,4], index: 9, kind: input, shape index: {}]
  %s10 = inlined_call_operand.vmem [shape: f32[8,1], index: 10, kind: input, shape index: {}]
  %s11 = inlined_call_operand.vmem [shape: f32[16,8], index: 11, kind: input, shape index: {}]
  %s12 = inlined_call_operand.vmem [shape: f32[16,1], index: 12, kind: input, shape index: {}]
  %s13 = inlined_call_operand.vmem [shape: f32[32,16], index: 13, kind: input, shape index: {}]
  %s14 = inlined_call_operand.vmem [shape: f32[32,1], index: 14, kind: input, shape index: {}]
  %s15 = inlined_call_operand.vmem [shape: f32[32,32], index: 15, kind: input, shape index: {}]
  %s16 = inlined_call_operand.vmem [shape: f32[32,1], index: 16, kind: input, shape index: {}]
  %s17 = inlined_call_operand.hbm [shape: f32[4,32,128], index: 17, kind: output, shape index: {}]
  %s18 = sld [smem:[#allocation0]]
  $region101: #{tpu_custom_call.1} parent=0
    _
  %s20 = ssub.s32 1, %s18
  %s21 = scalar_select 0, %s20, %s18
  $region1: #{tpu_custom_call.1} parent=0
    #allocation2 [shape = 'u8[65536]{0}', space=vmem, size = 0x10000, scoped, tag = 'output window, operand 0']
    #allocation3 [shape = 's32[2]{0}', space=sflag, size = 0x8, scoped, tag = 'scoped memory for tpu_custom_call.1']
    %22 = vsyncpa [#allocation3], 0
    %s23 = scalar_lea.sflag [#allocation3], 1
    %24 = vsyncpa %s23, 0
    loop: start=0, step=1, limit=4
    $region2: #{tpu_custom_call.1} parent=1 // loop_pre_header
      _
    $region3: #{tpu_custom_call.1} parent=1 // loop_header
      %s26 = sphi 0, %s30
      %p27 = scmp.ge.s32.totalorder %s26, 4
      %s36 = sphi 0, %s38
      %s39 = sphi 0, %s36
      %s40 = sphi 0, %s39
      %s56 = sphi 0, %s40
      %s60 = sphi 0, %s60
      %s62 = sphi 0, %s60
      %s63 = sphi 0, %s62
      %s77 = sphi 0, %s63
      %s81 = sphi 0, %s81
      %s83 = sphi 0, %s81
      %s84 = sphi 0, %s83
      %s98 = sphi 0, %s84
      %s102 = sphi 0, %s102
      %s104 = sphi 0, %s102
      %s105 = sphi 0, %s104
      %s119 = sphi 0, %s105
      %s123 = sphi 0, %s123
      %s125 = sphi 0, %s123
      %s126 = sphi 0, %s125
      %s140 = sphi 0, %s126
      %s144 = sphi 0, %s144
      %s146 = sphi 0, %s144
      %s147 = sphi 0, %s146
      %s161 = sphi 0, %s147
      %s165 = sphi 0, %s165
      %s167 = sphi 0, %s165
      %s168 = sphi 0, %s167
      %s182 = sphi 0, %s168
      %s186 = sphi 0, %s186
      %s188 = sphi 0, %s186
      %s189 = sphi 0, %s188
      %s203 = sphi 0, %s189
      %s207 = sphi 0, %s207
      %s209 = sphi 0, %s207
      %s210 = sphi 0, %s209
      %s224 = sphi 0, %s210
      %s228 = sphi 0, %s228
      %s230 = sphi 0, %s228
      %s231 = sphi 0, %s230
      %s245 = sphi 0, %s231
      %s249 = sphi 0, %s249
      %s251 = sphi 0, %s249
      %s252 = sphi 0, %s251
      %s266 = sphi 0, %s252
      %s270 = sphi 0, %s270
      %s272 = sphi 0, %s270
      %s273 = sphi 0, %s272
      %s287 = sphi 0, %s273
      %s291 = sphi 0, %s291
      %s293 = sphi 0, %s291
      %s294 = sphi 0, %s293
      %s308 = sphi 0, %s294
      %s312 = sphi 0, %s312
      %s314 = sphi 0, %s312
      %s315 = sphi 0, %s314
      %s329 = sphi 0, %s315
      %s333 = sphi 0, %s333
      %s335 = sphi 0, %s333
      %s336 = sphi 0, %s335
      %s350 = sphi 0, %s336
      %s354 = sphi 0, %s354
      %s356 = sphi 0, %s354
      %s357 = sphi 0, %s356
      %s371 = sphi 0, %s357
      %s375 = sphi 0, %s375
      %s377 = sphi 0, %s375
      %s378 = sphi 0, %s377
      %s392 = sphi 0, %s378
      %s398 = sphi 0, %s400
      %s401 = sphi 0, %s398
      %s402 = sphi 0, %s401
      %s418 = sphi 0, %s402
    $region4: #{tpu_custom_call.1} parent=1 // loop_header_branch
      %29 = sbr.rel (%p27) target = $region8
    $region5: #{tpu_custom_call.1} parent=1 // loop_body
      %s31 = ssub.s32 %s26, 1
      %s32 = ssub.s32 %s26, 2
      %s33 = sadd.s32 %s26, 1
      %s34 = ssub.s32 %s26, %s33
      %p35 = scmp.eq.s32.totalorder %s34, 0
      %s37 = sadd.s32 %s36, 1
      %s38 = scalar_select %p35, %s36, %s37
      %p41 = pneg %p35
      %p42 = scmp.eq.s32.totalorder %s26, 1
      %p43 = por %p41, %p42
      %p44 = scmp.ne.s32.totalorder %s36, %s39
      %p45 = scmp.eq.s32.totalorder %s26, 0
      %p46 = por %p44, %p45
      %p47 = scmp.ne.s32.totalorder %s36, %s39
      %p48 = scmp.eq.s32.totalorder %s31, 1
      %p49 = por %p47, %p48
      %p50 = scmp.ne.s32.totalorder %s39, %s40
      %p51 = scmp.eq.s32.totalorder %s31, 0
      %p52 = por %p50, %p51
      %p53 = scmp.ne.s32.totalorder %s39, %s40
      %p54 = scmp.eq.s32.totalorder %s32, 1
      %p55 = por %p53, %p54
      %p57 = scmp.ne.s32.totalorder %s40, %s56
      %p58 = scmp.eq.s32.totalorder %s32, 0
      %p59 = por %p57, %p58
      %s61 = sadd.s32 %s60, 1
      %p64 = scmp.eq.s32.totalorder %s26, 1
      %p65 = scmp.ne.s32.totalorder %s60, %s62
      %p66 = scmp.eq.s32.totalorder %s26, 0
      %p67 = por %p65, %p66
      %p68 = scmp.ne.s32.totalorder %s60, %s62
      %p69 = scmp.eq.s32.totalorder %s31, 1
      %p70 = por %p68, %p69
      %p71 = scmp.ne.s32.totalorder %s62, %s63
      %p72 = scmp.eq.s32.totalorder %s31, 0
      %p73 = por %p71, %p72
      %p74 = scmp.ne.s32.totalorder %s62, %s63
      %p75 = scmp.eq.s32.totalorder %s32, 1
      %p76 = por %p74, %p75
      %p78 = scmp.ne.s32.totalorder %s63, %s77
      %p79 = scmp.eq.s32.totalorder %s32, 0
      %p80 = por %p78, %p79
      %s82 = sadd.s32 %s81, 1
      %p85 = scmp.eq.s32.totalorder %s26, 1
      %p86 = scmp.ne.s32.totalorder %s81, %s83
      %p87 = scmp.eq.s32.totalorder %s26, 0
      %p88 = por %p86, %p87
      %p89 = scmp.ne.s32.totalorder %s81, %s83
      %p90 = scmp.eq.s32.totalorder %s31, 1
      %p91 = por %p89, %p90
      %p92 = scmp.ne.s32.totalorder %s83, %s84
      %p93 = scmp.eq.s32.totalorder %s31, 0
      %p94 = por %p92, %p93
      %p95 = scmp.ne.s32.totalorder %s83, %s84
      %p96 = scmp.eq.s32.totalorder %s32, 1
      %p97 = por %p95, %p96
      %p99 = scmp.ne.s32.totalorder %s84, %s98
      %p100 = scmp.eq.s32.totalorder %s32, 0
      %p101 = por %p99, %p100
      %s103 = sadd.s32 %s102, 1
      %p106 = scmp.eq.s32.totalorder %s26, 1
      %p107 = scmp.ne.s32.totalorder %s102, %s104
      %p108 = scmp.eq.s32.totalorder %s26, 0
      %p109 = por %p107, %p108
      %p110 = scmp.ne.s32.totalorder %s102, %s104
      %p111 = scmp.eq.s32.totalorder %s31, 1
      %p112 = por %p110, %p111
      %p113 = scmp.ne.s32.totalorder %s104, %s105
      %p114 = scmp.eq.s32.totalorder %s31, 0
      %p115 = por %p113, %p114
      %p116 = scmp.ne.s32.totalorder %s104, %s105
      %p117 = scmp.eq.s32.totalorder %s32, 1
      %p118 = por %p116, %p117
      %p120 = scmp.ne.s32.totalorder %s105, %s119
      %p121 = scmp.eq.s32.totalorder %s32, 0
      %p122 = por %p120, %p121
      %s124 = sadd.s32 %s123, 1
      %p127 = scmp.eq.s32.totalorder %s26, 1
      %p128 = scmp.ne.s32.totalorder %s123, %s125
      %p129 = scmp.eq.s32.totalorder %s26, 0
      %p130 = por %p128, %p129
      %p131 = scmp.ne.s32.totalorder %s123, %s125
      %p132 = scmp.eq.s32.totalorder %s31, 1
      %p133 = por %p131, %p132
      %p134 = scmp.ne.s32.totalorder %s125, %s126
      %p135 = scmp.eq.s32.totalorder %s31, 0
      %p136 = por %p134, %p135
      %p137 = scmp.ne.s32.totalorder %s125, %s126
      %p138 = scmp.eq.s32.totalorder %s32, 1
      %p139 = por %p137, %p138
      %p141 = scmp.ne.s32.totalorder %s126, %s140
      %p142 = scmp.eq.s32.totalorder %s32, 0
      %p143 = por %p141, %p142
      %s145 = sadd.s32 %s144, 1
      %p148 = scmp.eq.s32.totalorder %s26, 1
      %p149 = scmp.ne.s32.totalorder %s144, %s146
      %p150 = scmp.eq.s32.totalorder %s26, 0
      %p151 = por %p149, %p150
      %p152 = scmp.ne.s32.totalorder %s144, %s146
      %p153 = scmp.eq.s32.totalorder %s31, 1
      %p154 = por %p152, %p153
      %p155 = scmp.ne.s32.totalorder %s146, %s147
      %p156 = scmp.eq.s32.totalorder %s31, 0
      %p157 = por %p155, %p156
      %p158 = scmp.ne.s32.totalorder %s146, %s147
      %p159 = scmp.eq.s32.totalorder %s32, 1
      %p160 = por %p158, %p159
      %p162 = scmp.ne.s32.totalorder %s147, %s161
      %p163 = scmp.eq.s32.totalorder %s32, 0
      %p164 = por %p162, %p163
      %s166 = sadd.s32 %s165, 1
      %p169 = scmp.eq.s32.totalorder %s26, 1
      %p170 = scmp.ne.s32.totalorder %s165, %s167
      %p171 = scmp.eq.s32.totalorder %s26, 0
      %p172 = por %p170, %p171
      %p173 = scmp.ne.s32.totalorder %s165, %s167
      %p174 = scmp.eq.s32.totalorder %s31, 1
      %p175 = por %p173, %p174
      %p176 = scmp.ne.s32.totalorder %s167, %s168
      %p177 = scmp.eq.s32.totalorder %s31, 0
      %p178 = por %p176, %p177
      %p179 = scmp.ne.s32.totalorder %s167, %s168
      %p180 = scmp.eq.s32.totalorder %s32, 1
      %p181 = por %p179, %p180
      %p183 = scmp.ne.s32.totalorder %s168, %s182
      %p184 = scmp.eq.s32.totalorder %s32, 0
      %p185 = por %p183, %p184
      %s187 = sadd.s32 %s186, 1
      %p190 = scmp.eq.s32.totalorder %s26, 1
      %p191 = scmp.ne.s32.totalorder %s186, %s188
      %p192 = scmp.eq.s32.totalorder %s26, 0
      %p193 = por %p191, %p192
      %p194 = scmp.ne.s32.totalorder %s186, %s188
      %p195 = scmp.eq.s32.totalorder %s31, 1
      %p196 = por %p194, %p195
      %p197 = scmp.ne.s32.totalorder %s188, %s189
      %p198 = scmp.eq.s32.totalorder %s31, 0
      %p199 = por %p197, %p198
      %p200 = scmp.ne.s32.totalorder %s188, %s189
      %p201 = scmp.eq.s32.totalorder %s32, 1
      %p202 = por %p200, %p201
      %p204 = scmp.ne.s32.totalorder %s189, %s203
      %p205 = scmp.eq.s32.totalorder %s32, 0
      %p206 = por %p204, %p205
      %s208 = sadd.s32 %s207, 1
      %p211 = scmp.eq.s32.totalorder %s26, 1
      %p212 = scmp.ne.s32.totalorder %s207, %s209
      %p213 = scmp.eq.s32.totalorder %s26, 0
      %p214 = por %p212, %p213
      %p215 = scmp.ne.s32.totalorder %s207, %s209
      %p216 = scmp.eq.s32.totalorder %s31, 1
      %p217 = por %p215, %p216
      %p218 = scmp.ne.s32.totalorder %s209, %s210
      %p219 = scmp.eq.s32.totalorder %s31, 0
      %p220 = por %p218, %p219
      %p221 = scmp.ne.s32.totalorder %s209, %s210
      %p222 = scmp.eq.s32.totalorder %s32, 1
      %p223 = por %p221, %p222
      %p225 = scmp.ne.s32.totalorder %s210, %s224
      %p226 = scmp.eq.s32.totalorder %s32, 0
      %p227 = por %p225, %p226
      %s229 = sadd.s32 %s228, 1
      %p232 = scmp.eq.s32.totalorder %s26, 1
      %p233 = scmp.ne.s32.totalorder %s228, %s230
      %p234 = scmp.eq.s32.totalorder %s26, 0
      %p235 = por %p233, %p234
      %p236 = scmp.ne.s32.totalorder %s228, %s230
      %p237 = scmp.eq.s32.totalorder %s31, 1
      %p238 = por %p236, %p237
      %p239 = scmp.ne.s32.totalorder %s230, %s231
      %p240 = scmp.eq.s32.totalorder %s31, 0
      %p241 = por %p239, %p240
      %p242 = scmp.ne.s32.totalorder %s230, %s231
      %p243 = scmp.eq.s32.totalorder %s32, 1
      %p244 = por %p242, %p243
      %p246 = scmp.ne.s32.totalorder %s231, %s245
      %p247 = scmp.eq.s32.totalorder %s32, 0
      %p248 = por %p246, %p247
      %s250 = sadd.s32 %s249, 1
      %p253 = scmp.eq.s32.totalorder %s26, 1
      %p254 = scmp.ne.s32.totalorder %s249, %s251
      %p255 = scmp.eq.s32.totalorder %s26, 0
      %p256 = por %p254, %p255
      %p257 = scmp.ne.s32.totalorder %s249, %s251
      %p258 = scmp.eq.s32.totalorder %s31, 1
      %p259 = por %p257, %p258
      %p260 = scmp.ne.s32.totalorder %s251, %s252
      %p261 = scmp.eq.s32.totalorder %s31, 0
      %p262 = por %p260, %p261
      %p263 = scmp.ne.s32.totalorder %s251, %s252
      %p264 = scmp.eq.s32.totalorder %s32, 1
      %p265 = por %p263, %p264
      %p267 = scmp.ne.s32.totalorder %s252, %s266
      %p268 = scmp.eq.s32.totalorder %s32, 0
      %p269 = por %p267, %p268
      %s271 = sadd.s32 %s270, 1
      %p274 = scmp.eq.s32.totalorder %s26, 1
      %p275 = scmp.ne.s32.totalorder %s270, %s272
      %p276 = scmp.eq.s32.totalorder %s26, 0
      %p277 = por %p275, %p276
      %p278 = scmp.ne.s32.totalorder %s270, %s272
      %p279 = scmp.eq.s32.totalorder %s31, 1
      %p280 = por %p278, %p279
      %p281 = scmp.ne.s32.totalorder %s272, %s273
      %p282 = scmp.eq.s32.totalorder %s31, 0
      %p283 = por %p281, %p282
      %p284 = scmp.ne.s32.totalorder %s272, %s273
      %p285 = scmp.eq.s32.totalorder %s32, 1
      %p286 = por %p284, %p285
      %p288 = scmp.ne.s32.totalorder %s273, %s287
      %p289 = scmp.eq.s32.totalorder %s32, 0
      %p290 = por %p288, %p289
      %s292 = sadd.s32 %s291, 1
      %p295 = scmp.eq.s32.totalorder %s26, 1
      %p296 = scmp.ne.s32.totalorder %s291, %s293
      %p297 = scmp.eq.s32.totalorder %s26, 0
      %p298 = por %p296, %p297
      %p299 = scmp.ne.s32.totalorder %s291, %s293
      %p300 = scmp.eq.s32.totalorder %s31, 1
      %p301 = por %p299, %p300
      %p302 = scmp.ne.s32.totalorder %s293, %s294
      %p303 = scmp.eq.s32.totalorder %s31, 0
      %p304 = por %p302, %p303
      %p305 = scmp.ne.s32.totalorder %s293, %s294
      %p306 = scmp.eq.s32.totalorder %s32, 1
      %p307 = por %p305, %p306
      %p309 = scmp.ne.s32.totalorder %s294, %s308
      %p310 = scmp.eq.s32.totalorder %s32, 0
      %p311 = por %p309, %p310
      %s313 = sadd.s32 %s312, 1
      %p316 = scmp.eq.s32.totalorder %s26, 1
      %p317 = scmp.ne.s32.totalorder %s312, %s314
      %p318 = scmp.eq.s32.totalorder %s26, 0
      %p319 = por %p317, %p318
      %p320 = scmp.ne.s32.totalorder %s312, %s314
      %p321 = scmp.eq.s32.totalorder %s31, 1
      %p322 = por %p320, %p321
      %p323 = scmp.ne.s32.totalorder %s314, %s315
      %p324 = scmp.eq.s32.totalorder %s31, 0
      %p325 = por %p323, %p324
      %p326 = scmp.ne.s32.totalorder %s314, %s315
      %p327 = scmp.eq.s32.totalorder %s32, 1
      %p328 = por %p326, %p327
      %p330 = scmp.ne.s32.totalorder %s315, %s329
      %p331 = scmp.eq.s32.totalorder %s32, 0
      %p332 = por %p330, %p331
      %s334 = sadd.s32 %s333, 1
      %p337 = scmp.eq.s32.totalorder %s26, 1
      %p338 = scmp.ne.s32.totalorder %s333, %s335
      %p339 = scmp.eq.s32.totalorder %s26, 0
      %p340 = por %p338, %p339
      %p341 = scmp.ne.s32.totalorder %s333, %s335
      %p342 = scmp.eq.s32.totalorder %s31, 1
      %p343 = por %p341, %p342
      %p344 = scmp.ne.s32.totalorder %s335, %s336
      %p345 = scmp.eq.s32.totalorder %s31, 0
      %p346 = por %p344, %p345
      %p347 = scmp.ne.s32.totalorder %s335, %s336
      %p348 = scmp.eq.s32.totalorder %s32, 1
      %p349 = por %p347, %p348
      %p351 = scmp.ne.s32.totalorder %s336, %s350
      %p352 = scmp.eq.s32.totalorder %s32, 0
      %p353 = por %p351, %p352
      %s355 = sadd.s32 %s354, 1
      %p358 = scmp.eq.s32.totalorder %s26, 1
      %p359 = scmp.ne.s32.totalorder %s354, %s356
      %p360 = scmp.eq.s32.totalorder %s26, 0
      %p361 = por %p359, %p360
      %p362 = scmp.ne.s32.totalorder %s354, %s356
      %p363 = scmp.eq.s32.totalorder %s31, 1
      %p364 = por %p362, %p363
      %p365 = scmp.ne.s32.totalorder %s356, %s357
      %p366 = scmp.eq.s32.totalorder %s31, 0
      %p367 = por %p365, %p366
      %p368 = scmp.ne.s32.totalorder %s356, %s357
      %p369 = scmp.eq.s32.totalorder %s32, 1
      %p370 = por %p368, %p369
      %p372 = scmp.ne.s32.totalorder %s357, %s371
      %p373 = scmp.eq.s32.totalorder %s32, 0
      %p374 = por %p372, %p373
      %s376 = sadd.s32 %s375, 1
      %p379 = scmp.eq.s32.totalorder %s26, 1
      %p380 = scmp.ne.s32.totalorder %s375, %s377
      %p381 = scmp.eq.s32.totalorder %s26, 0
      %p382 = por %p380, %p381
      %p383 = scmp.ne.s32.totalorder %s375, %s377
      %p384 = scmp.eq.s32.totalorder %s31, 1
      %p385 = por %p383, %p384
      %p386 = scmp.ne.s32.totalorder %s377, %s378
      %p387 = scmp.eq.s32.totalorder %s31, 0
      %p388 = por %p386, %p387
      %p389 = scmp.ne.s32.totalorder %s377, %s378
      %p390 = scmp.eq.s32.totalorder %s32, 1
      %p391 = por %p389, %p390
      %p393 = scmp.ne.s32.totalorder %s378, %s392
      %p394 = scmp.eq.s32.totalorder %s32, 0
      %p395 = por %p393, %p394
      %s396 = ssub.s32 %s26, %s33
      %p397 = scmp.eq.s32.totalorder %s396, 0
      %s399 = sadd.s32 %s398, 1
      %s400 = scalar_select %p397, %s398, %s399
      %p403 = pneg %p397
      %p404 = scmp.eq.s32.totalorder %s26, 1
      %p405 = por %p403, %p404
      %p406 = scmp.ne.s32.totalorder %s398, %s401
      %p407 = scmp.eq.s32.totalorder %s26, 0
      %p408 = por %p406, %p407
      %p409 = scmp.ne.s32.totalorder %s398, %s401
      %p410 = scmp.eq.s32.totalorder %s31, 1
      %p411 = por %p409, %p410
      %p412 = scmp.ne.s32.totalorder %s401, %s402
      %p413 = scmp.eq.s32.totalorder %s31, 0
      %p414 = por %p412, %p413
      %p415 = scmp.ne.s32.totalorder %s401, %s402
      %p416 = scmp.eq.s32.totalorder %s32, 1
      %p417 = por %p415, %p416
      %p419 = scmp.ne.s32.totalorder %s402, %s418
      %p420 = scmp.eq.s32.totalorder %s32, 0
      %p421 = por %p419, %p420
      %p422 = scmp.le.s32.totalorder 1, %s26
      %p423 = scmp.lt.s32.totalorder %s26, 3
      %p424 = pnand %p422, %p423
      %p425 = pneg %p424
      // Predicated region
      $region9: #{tpu_custom_call.1} parent=5 // pred_check
        _
      $region10: #{tpu_custom_call.1} parent=5 // pred_check_branch
        %427 = sbr.rel (%p424) target = $region12
      $region11: #{tpu_custom_call.1} parent=5 // pred_region
        %s428 = ssub.s32 %s26, 1
        // Predicated region
        $region13: #{tpu_custom_call.1} parent=11 // pred_check
          %p429 = pneg %p73
        $region14: #{tpu_custom_call.1} parent=11 // pred_check_branch
          %431 = sbr.rel (%p429) target = $region16
        $region15: #{tpu_custom_call.1} parent=11 // pred_region
          _
        $region16: #{tpu_custom_call.1} parent=11 // pred_fallthru
          _
        // Predicated region
        $region17: #{tpu_custom_call.1} parent=11 // pred_check
          %p432 = pneg %p94
        $region18: #{tpu_custom_call.1} parent=11 // pred_check_branch
          %434 = sbr.rel (%p432) target = $region20
        $region19: #{tpu_custom_call.1} parent=11 // pred_region
          _
        $region20: #{tpu_custom_call.1} parent=11 // pred_fallthru
          _
        // Predicated region
        $region21: #{tpu_custom_call.1} parent=11 // pred_check
          %p435 = pneg %p115
        $region22: #{tpu_custom_call.1} parent=11 // pred_check_branch
          %437 = sbr.rel (%p435) target = $region24
        $region23: #{tpu_custom_call.1} parent=11 // pred_region
          _
        $region24: #{tpu_custom_call.1} parent=11 // pred_fallthru
          _
        // Predicated region
        $region25: #{tpu_custom_call.1} parent=11 // pred_check
          %p438 = pneg %p136
        $region26: #{tpu_custom_call.1} parent=11 // pred_check_branch
          %440 = sbr.rel (%p438) target = $region28
        $region27: #{tpu_custom_call.1} parent=11 // pred_region
          _
        $region28: #{tpu_custom_call.1} parent=11 // pred_fallthru
          _
        // Predicated region
        $region29: #{tpu_custom_call.1} parent=11 // pred_check
          %p441 = pneg %p157
        $region30: #{tpu_custom_call.1} parent=11 // pred_check_branch
          %443 = sbr.rel (%p441) target = $region32
        $region31: #{tpu_custom_call.1} parent=11 // pred_region
          _
        $region32: #{tpu_custom_call.1} parent=11 // pred_fallthru
          _
        // Predicated region
        $region33: #{tpu_custom_call.1} parent=11 // pred_check
          %p444 = pneg %p178
        $region34: #{tpu_custom_call.1} parent=11 // pred_check_branch
          %446 = sbr.rel (%p444) target = $region36
        $region35: #{tpu_custom_call.1} parent=11 // pred_region
          _
        $region36: #{tpu_custom_call.1} parent=11 // pred_fallthru
          _
        // Predicated region
        $region37: #{tpu_custom_call.1} parent=11 // pred_check
          %p447 = pneg %p199
        $region38: #{tpu_custom_call.1} parent=11 // pred_check_branch
          %449 = sbr.rel (%p447) target = $region40
        $region39: #{tpu_custom_call.1} parent=11 // pred_region
          _
        $region40: #{tpu_custom_call.1} parent=11 // pred_fallthru
          _
        // Predicated region
        $region41: #{tpu_custom_call.1} parent=11 // pred_check
          %p450 = pneg %p220
        $region42: #{tpu_custom_call.1} parent=11 // pred_check_branch
          %452 = sbr.rel (%p450) target = $region44
        $region43: #{tpu_custom_call.1} parent=11 // pred_region
          _
        $region44: #{tpu_custom_call.1} parent=11 // pred_fallthru
          _
        // Predicated region
        $region45: #{tpu_custom_call.1} parent=11 // pred_check
          %p453 = pneg %p241
        $region46: #{tpu_custom_call.1} parent=11 // pred_check_branch
          %455 = sbr.rel (%p453) target = $region48
        $region47: #{tpu_custom_call.1} parent=11 // pred_region
          _
        $region48: #{tpu_custom_call.1} parent=11 // pred_fallthru
          _
        // Predicated region
        $region49: #{tpu_custom_call.1} parent=11 // pred_check
          %p456 = pneg %p262
        $region50: #{tpu_custom_call.1} parent=11 // pred_check_branch
          %458 = sbr.rel (%p456) target = $region52
        $region51: #{tpu_custom_call.1} parent=11 // pred_region
          _
        $region52: #{tpu_custom_call.1} parent=11 // pred_fallthru
          _
        // Predicated region
        $region53: #{tpu_custom_call.1} parent=11 // pred_check
          %p459 = pneg %p283
        $region54: #{tpu_custom_call.1} parent=11 // pred_check_branch
          %461 = sbr.rel (%p459) target = $region56
        $region55: #{tpu_custom_call.1} parent=11 // pred_region
          _
        $region56: #{tpu_custom_call.1} parent=11 // pred_fallthru
          _
        // Predicated region
        $region57: #{tpu_custom_call.1} parent=11 // pred_check
          %p462 = pneg %p304
        $region58: #{tpu_custom_call.1} parent=11 // pred_check_branch
          %464 = sbr.rel (%p462) target = $region60
        $region59: #{tpu_custom_call.1} parent=11 // pred_region
          _
        $region60: #{tpu_custom_call.1} parent=11 // pred_fallthru
          _
        // Predicated region
        $region61: #{tpu_custom_call.1} parent=11 // pred_check
          %p465 = pneg %p325
        $region62: #{tpu_custom_call.1} parent=11 // pred_check_branch
          %467 = sbr.rel (%p465) target = $region64
        $region63: #{tpu_custom_call.1} parent=11 // pred_region
          _
        $region64: #{tpu_custom_call.1} parent=11 // pred_fallthru
          _
        // Predicated region
        $region65: #{tpu_custom_call.1} parent=11 // pred_check
          %p468 = pneg %p346
        $region66: #{tpu_custom_call.1} parent=11 // pred_check_branch
          %470 = sbr.rel (%p468) target = $region68
        $region67: #{tpu_custom_call.1} parent=11 // pred_region
          _
        $region68: #{tpu_custom_call.1} parent=11 // pred_fallthru
          _
        // Predicated region
        $region69: #{tpu_custom_call.1} parent=11 // pred_check
          %p471 = pneg %p367
        $region70: #{tpu_custom_call.1} parent=11 // pred_check_branch
          %473 = sbr.rel (%p471) target = $region72
        $region71: #{tpu_custom_call.1} parent=11 // pred_region
          _
        $region72: #{tpu_custom_call.1} parent=11 // pred_fallthru
          _
        // Predicated region
        $region73: #{tpu_custom_call.1} parent=11 // pred_check
          %p474 = pneg %p388
        $region74: #{tpu_custom_call.1} parent=11 // pred_check_branch
          %476 = sbr.rel (%p474) target = $region76
        $region75: #{tpu_custom_call.1} parent=11 // pred_region
          _
        $region76: #{tpu_custom_call.1} parent=11 // pred_fallthru
          _
      $region12: #{tpu_custom_call.1} parent=5 // pred_fallthru
        _
      %p477 = scmp.lt.s32.totalorder %s26, 2
      // Predicated region
      $region77: #{tpu_custom_call.1} parent=5 // pred_check
        %p478 = pneg %p477
      $region78: #{tpu_custom_call.1} parent=5 // pred_check_branch
        %480 = sbr.rel (%p478) target = $region80
      $region79: #{tpu_custom_call.1} parent=5 // pred_region
        // Predicated region
        $region81: #{tpu_custom_call.1} parent=79 // pred_check
          %p481 = pneg %p46
        $region82: #{tpu_custom_call.1} parent=79 // pred_check_branch
          %483 = sbr.rel (%p481) target = $region84
        $region83: #{tpu_custom_call.1} parent=79 // pred_region
          %s484 = smul.u32 2, %s26
          %p485 = scmp.lt.s32.totalorder %s484, 3
          %s486 = scalar_select %p485, %s484, 3
          %s487 = smul.addr %s486, 4
          %s488 = smul.addr %s487, 8
          %s489 = scalar_lea.vmem %s0, %s488
          %s490 = smul.u32 2, %s26
        $region84: #{tpu_custom_call.1} parent=79 // pred_fallthru
          _
      $region80: #{tpu_custom_call.1} parent=5 // pred_fallthru
        _
      %p491 = scmp.le.s32.totalorder 1, %s26
      %p492 = scmp.lt.s32.totalorder %s26, 3
      %p493 = pnand %p491, %p492
      %p494 = pneg %p493
      // Predicated region
      $region85: #{tpu_custom_call.1} parent=5 // pred_check
        _
      $region86: #{tpu_custom_call.1} parent=5 // pred_check_branch
        %496 = sbr.rel (%p493) target = $region88
      $region87: #{tpu_custom_call.1} parent=5 // pred_region
        %s497 = ssub.s32 %s26, 1
        %s498 = smul.u32 2, %s31
        %p499 = scmp.lt.s32.totalorder %s498, 3
        %s500 = scalar_select %p499, %s498, 3
        %s501 = smul.addr %s500, 4
        %s502 = smul.addr %s501, 8
        %s503 = scalar_lea.vmem %s0, %s502
        %p504 = pneg %p52
        %p505 = pneg %p49
        %p506 = pneg %p73
        %p507 = pneg %p70
        %p508 = pneg %p94
        %p509 = pneg %p91
        %p510 = pneg %p115
        %p511 = pneg %p112
        %p512 = pneg %p136
        %p513 = pneg %p133
        %p514 = pneg %p157
        %p515 = pneg %p154
        %p516 = pneg %p178
        %p517 = pneg %p175
        %p518 = pneg %p199
        %p519 = pneg %p196
        %p520 = pneg %p220
        %p521 = pneg %p217
        %p522 = pneg %p241
        %p523 = pneg %p238
        %p524 = pneg %p262
        %p525 = pneg %p259
        %p526 = pneg %p283
        %p527 = pneg %p280
        %p528 = pneg %p304
        %p529 = pneg %p301
        %p530 = pneg %p325
        %p531 = pneg %p322
        %p532 = pneg %p346
        %p533 = pneg %p343
        %p534 = pneg %p367
        %p535 = pneg %p364
        %p536 = pneg %p388
        %p537 = pneg %p385
        %p538 = pneg %p414
        %p539 = pneg %p411
        %s540 = sand.u32 %s401, 1
        %s541 = scalar_lea.sflag [#allocation3], %s540
        %s542 = sand.u32 %s401, 1
        %s543 = smul.addr %s542, 64
        %s544 = scalar_lea.vmem [#allocation2], %s543
        %s545 = smul.u32 2, %s31
        %p546 = scmp.lt.s32.totalorder %s545, 3
        %s547 = scalar_select %p546, %s545, 3
        %s548 = smul.addr %s547, 4
        %s549 = smul.addr %s548, 8
        %s550 = scalar_lea.vmem %s0, %s549
        %s551 = smul.u32 2, %s31
        %s552 = smul.u32 2, %s31
        %v553 = vld [vmem:[%s1] sm:$0x3]
        %v554 = vld [vmem:[%s2] sm:$0x3]
        %v555 = vld [vmem:[%s3] sm:$0xff]
        %v556 = vld [vmem:[%s3 + $0x8] sm:$0xff]
        %v557 = vld [vmem:[%s3 + $0x10] sm:$0xff]
        %v558 = vld [vmem:[%s3 + $0x18] sm:$0xff]
        %v559 = vld [vmem:[%s3 + $0x20] sm:$0xff]
        %v560 = vld [vmem:[%s3 + $0x28] sm:$0xff]
        %v561 = vld [vmem:[%s3 + $0x30] sm:$0xff]
        %v562 = vld [vmem:[%s3 + $0x38] sm:$0x3f]
        %v563 = vld [vmem:[%s4] sm:$0xff]
        %v564 = vld [vmem:[%s4 + $0x8] sm:$0xff]
        %v565 = vld [vmem:[%s4 + $0x10] sm:$0xff]
        %v566 = vld [vmem:[%s4 + $0x18] sm:$0xff]
        %v567 = vld [vmem:[%s4 + $0x20] sm:$0xff]
        %v568 = vld [vmem:[%s4 + $0x28] sm:$0xff]
        %v569 = vld [vmem:[%s4 + $0x30] sm:$0xff]
        %v570 = vld [vmem:[%s4 + $0x38] sm:$0x3f]
        %v571 = vld [vmem:[%s5] sm:$0xff]
        %v572 = vld [vmem:[%s5 + $0x8] sm:$0xff]
        %v573 = vld [vmem:[%s5 + $0x10] sm:$0xff]
        %v574 = vld [vmem:[%s5 + $0x18] sm:$0xff]
        %v575 = vld [vmem:[%s5 + $0x20] sm:$0xff]
        %v576 = vld [vmem:[%s5 + $0x28] sm:$0xff]
        %v577 = vld [vmem:[%s5 + $0x30] sm:$0xff]
        %v578 = vld [vmem:[%s5 + $0x38] sm:$0x3f]
        %v579 = vld [vmem:[%s6] sm:$0xff]
        %v580 = vld [vmem:[%s6 + $0x8] sm:$0xff]
        %v581 = vld [vmem:[%s6 + $0x10] sm:$0xff]
        %v582 = vld [vmem:[%s6 + $0x18] sm:$0xff]
        %v583 = vld [vmem:[%s6 + $0x20] sm:$0xff]
        %v584 = vld [vmem:[%s6 + $0x28] sm:$0xff]
        %v585 = vld [vmem:[%s6 + $0x30] sm:$0xff]
        %v586 = vld [vmem:[%s6 + $0x38] sm:$0x3f]
        %v587 = vld [vmem:[%s7] sm:$0xf]
        %v588 = vld [vmem:[%s9] sm:$0xff]
        %v589 = vld [vmem:[%s11] sm:$0xff]
        %v590 = vld [vmem:[%s11 + $0x8] sm:$0xff]
        %v591 = vld [vmem:[%s13] sm:$0xff]
        %v592 = vld [vmem:[%s13 + $0x8] sm:$0xff]
        %v593 = vld [vmem:[%s13 + $0x10] sm:$0xff]
        %v594 = vld [vmem:[%s13 + $0x18] sm:$0xff]
        %v595 = vld [vmem:[%s8] sm:$0xf]
        %v596 = vld [vmem:[%s10] sm:$0xff]
        %v597 = vld [vmem:[%s12] sm:$0xff]
        %v598 = vld [vmem:[%s12 + $0x8] sm:$0xff]
        %v599 = vld [vmem:[%s14] sm:$0xff]
        %v600 = vld [vmem:[%s14 + $0x8] sm:$0xff]
        %v601 = vld [vmem:[%s14 + $0x10] sm:$0xff]
        %v602 = vld [vmem:[%s14 + $0x18] sm:$0xff]
        %v603 = vld [vmem:[%s15] sm:$0xff]
        %v604 = vld [vmem:[%s15 + $0x8] sm:$0xff]
        %v605 = vld [vmem:[%s15 + $0x10] sm:$0xff]
        %v606 = vld [vmem:[%s15 + $0x18] sm:$0xff]
        %v607 = vld [vmem:[%s16] sm:$0xff]
        %v608 = vld [vmem:[%s16 + $0x8] sm:$0xff]
        %v609 = vld [vmem:[%s16 + $0x10] sm:$0xff]
        %v610 = vld [vmem:[%s16 + $0x18] sm:$0xff]
        %v611 = vld [vmem:[%s550] sm:$0xff]
        %v612 = vld [vmem:[%s550 + $0x8] sm:$0xff]
        %v613 = vld [vmem:[%s550 + $0x10] sm:$0xff]
        %v614 = vld [vmem:[%s550 + $0x18] sm:$0xff]
        %616 = vset.pattern.permute.xlu0 0
        %617 = vperm.xlu0 %616, %v554
        %v618 = vpop.permute.xlu0 %617
        %vm620 = vcmask 261120
        %v622 = vsel %vm620, %v553, 0
        %624 = vmatpush.msra.mxu0 0.0
        %625 = vmatpush.msra.mxu0 0.0
        %626 = vmatpush.msra.mxu0 0.0
        %627 = vmatpush.msra.mxu0 0.0
        %628 = vmatpush.msra.mxu0 0.0
        %629 = vmatpush.msra.mxu0 0.0
        %630 = vmatpush.msra.mxu0 0.0
        %631 = vmatpush.msra.mxu0 0.0
        %632 = vmatpush.msra.mxu0 0.0
        %633 = vmatpush.msra.mxu0 0.0
        %634 = vmatpush.msra.mxu0 0.0
        %635 = vmatpush.msra.mxu0 0.0
        %636 = vmatpush.msra.mxu0 %v614
        %637 = vmatpush.msra.mxu0 %v613
        %638 = vmatpush.msra.mxu0 %v612
        %639 = vmatpush.msra.mxu0 %v611
        %640 = vmatmul.f32.gmra.mxu0 %v622
        %v641 = vpop.f32.mrf.mxu0
        %v642 = vadd.f32 %v618, %v641
        %643 = vdwg.mxu0
        %645 = vset.pattern.permute.xlu0 0
        %646 = vperm.xlu0 %645, %v563
        %v647 = vpop.permute.xlu0 %646
        %650 = vset.pattern.permute.xlu0 0
        %651 = vperm.xlu0 %650, %v564
        %v652 = vpop.permute.xlu0 %651
        %655 = vset.pattern.permute.xlu0 0
        %656 = vperm.xlu0 %655, %v565
        %v657 = vpop.permute.xlu0 %656
        %660 = vset.pattern.permute.xlu0 0
        %661 = vperm.xlu0 %660, %v566
        %v662 = vpop.permute.xlu0 %661
        %665 = vset.pattern.permute.xlu0 0
        %666 = vperm.xlu0 %665, %v567
        %v667 = vpop.permute.xlu0 %666
        %670 = vset.pattern.permute.xlu0 0
        %671 = vperm.xlu0 %670, %v568
        %v672 = vpop.permute.xlu0 %671
        %675 = vset.pattern.permute.xlu0 0
        %676 = vperm.xlu0 %675, %v569
        %v677 = vpop.permute.xlu0 %676
        %680 = vset.pattern.permute.xlu0 0
        %681 = vperm.xlu0 %680, %v570
        %v682 = vpop.permute.xlu0 %681
        %v685 = vsel %vm620, %v555, 0
        %v688 = vsel %vm620, %v556, 0
        %v691 = vsel %vm620, %v557, 0
        %v694 = vsel %vm620, %v558, 0
        %v697 = vsel %vm620, %v559, 0
        %v700 = vsel %vm620, %v560, 0
        %v703 = vsel %vm620, %v561, 0
        %v706 = vsel %vm620, %v562, 0
        %708 = vmatpush.msra.mxu0 0.0
        %709 = vmatpush.msra.mxu0 0.0
        %710 = vmatpush.msra.mxu0 0.0
        %711 = vmatpush.msra.mxu0 0.0
        %712 = vmatpush.msra.mxu0 0.0
        %713 = vmatpush.msra.mxu0 0.0
        %714 = vmatpush.msra.mxu0 0.0
        %715 = vmatpush.msra.mxu0 0.0
        %716 = vmatpush.msra.mxu0 0.0
        %717 = vmatpush.msra.mxu0 0.0
        %718 = vmatpush.msra.mxu0 0.0
        %719 = vmatpush.msra.mxu0 0.0
        %720 = vmatpush.msra.mxu0 %v614
        %721 = vmatpush.msra.mxu0 %v613
        %722 = vmatpush.msra.mxu0 %v612
        %723 = vmatpush.msra.mxu0 %v611
        %724 = vmatmul.f32.gmra.mxu0 %v685
        %v725 = vpop.f32.mrf.mxu0
        %v726 = vadd.f32 %v647, %v725
        %727 = vmatmul.f32.gmra.mxu0 %v688
        %v728 = vpop.f32.mrf.mxu0
        %v729 = vadd.f32 %v652, %v728
        %730 = vmatmul.f32.gmra.mxu0 %v691
        %v731 = vpop.f32.mrf.mxu0
        %v732 = vadd.f32 %v657, %v731
        %733 = vmatmul.f32.gmra.mxu0 %v694
        %v734 = vpop.f32.mrf.mxu0
        %v735 = vadd.f32 %v662, %v734
        %736 = vmatmul.f32.gmra.mxu0 %v697
        %v737 = vpop.f32.mrf.mxu0
        %v738 = vadd.f32 %v667, %v737
        %739 = vmatmul.f32.gmra.mxu0 %v700
        %v740 = vpop.f32.mrf.mxu0
        %v741 = vadd.f32 %v672, %v740
        %742 = vmatmul.f32.gmra.mxu0 %v703
        %v743 = vpop.f32.mrf.mxu0
        %v744 = vadd.f32 %v677, %v743
        %745 = vmatmul.f32.gmra.mxu0 %v706
        %v746 = vpop.f32.mrf.mxu0
        %v747 = vadd.f32 %v682, %v746
        %748 = vdwg.mxu0
        %750 = vset.pattern.permute.xlu0 0
        %751 = vperm.xlu0 %750, %v579
        %v752 = vpop.permute.xlu0 %751
        %755 = vset.pattern.permute.xlu0 0
        %756 = vperm.xlu0 %755, %v580
        %v757 = vpop.permute.xlu0 %756
        %760 = vset.pattern.permute.xlu0 0
        %761 = vperm.xlu0 %760, %v581
        %v762 = vpop.permute.xlu0 %761
        %765 = vset.pattern.permute.xlu0 0
        %766 = vperm.xlu0 %765, %v582
        %v767 = vpop.permute.xlu0 %766
        %770 = vset.pattern.permute.xlu0 0
        %771 = vperm.xlu0 %770, %v583
        %v772 = vpop.permute.xlu0 %771
        %775 = vset.pattern.permute.xlu0 0
        %776 = vperm.xlu0 %775, %v584
        %v777 = vpop.permute.xlu0 %776
        %780 = vset.pattern.permute.xlu0 0
        %781 = vperm.xlu0 %780, %v585
        %v782 = vpop.permute.xlu0 %781
        %785 = vset.pattern.permute.xlu0 0
        %786 = vperm.xlu0 %785, %v586
        %v787 = vpop.permute.xlu0 %786
        %v789 = vadd.f32 %v752, 0.0
        %v790 = vadd.f32 %v757, 0.0
        %v791 = vadd.f32 %v762, 0.0
        %v792 = vadd.f32 %v767, 0.0
        %v793 = vadd.f32 %v772, 0.0
        %v794 = vadd.f32 %v777, 0.0
        %v795 = vadd.f32 %v782, 0.0
        %v796 = vadd.f32 %v787, 0.0
        %805 = vrot.lane.b32.xlu0 %v726, 3
        %v806 = vpop.permute.xlu0 %805
        %807 = vrot.lane.b32.xlu0 %v729, 3
        %v808 = vpop.permute.xlu0 %807
        %809 = vrot.lane.b32.xlu0 %v732, 3
        %v810 = vpop.permute.xlu0 %809
        %811 = vrot.lane.b32.xlu0 %v735, 3
        %v812 = vpop.permute.xlu0 %811
        %813 = vrot.lane.b32.xlu0 %v738, 3
        %v814 = vpop.permute.xlu0 %813
        %815 = vrot.lane.b32.xlu0 %v741, 3
        %v816 = vpop.permute.xlu0 %815
        %817 = vrot.lane.b32.xlu0 %v744, 3
        %v818 = vpop.permute.xlu0 %817
        %819 = vrot.lane.b32.xlu0 %v747, 3
        %v820 = vpop.permute.xlu0 %819
        %vm829 = vcmask 23552
        %v830 = vsel %vm829, 0.0, %v806
        %v831 = vsel %vm829, 0.0, %v808
        %v832 = vsel %vm829, 0.0, %v810
        %v833 = vsel %vm829, 0.0, %v812
        %v834 = vsel %vm829, 0.0, %v814
        %v835 = vsel %vm829, 0.0, %v816
        %v836 = vsel %vm829, 0.0, %v818
        %v837 = vsel %vm829, 0.0, %v820
        %839 = vset.pattern.permute.xlu0 0
        %840 = vperm.xlu0 %839, %v571
        %v841 = vpop.permute.xlu0 %840
        %844 = vset.pattern.permute.xlu0 0
        %845 = vperm.xlu0 %844, %v572
        %v846 = vpop.permute.xlu0 %845
        %849 = vset.pattern.permute.xlu0 0
        %850 = vperm.xlu0 %849, %v573
        %v851 = vpop.permute.xlu0 %850
        %854 = vset.pattern.permute.xlu0 0
        %855 = vperm.xlu0 %854, %v574
        %v856 = vpop.permute.xlu0 %855
        %859 = vset.pattern.permute.xlu0 0
        %860 = vperm.xlu0 %859, %v575
        %v861 = vpop.permute.xlu0 %860
        %864 = vset.pattern.permute.xlu0 0
        %865 = vperm.xlu0 %864, %v576
        %v866 = vpop.permute.xlu0 %865
        %869 = vset.pattern.permute.xlu0 0
        %870 = vperm.xlu0 %869, %v577
        %v871 = vpop.permute.xlu0 %870
        %874 = vset.pattern.permute.xlu0 0
        %875 = vperm.xlu0 %874, %v578
        %v876 = vpop.permute.xlu0 %875
        %v878 = vmul.f32 %v841, %v830
        %v879 = vmul.f32 %v846, %v831
        %v880 = vmul.f32 %v851, %v832
        %v881 = vmul.f32 %v856, %v833
        %v882 = vmul.f32 %v861, %v834
        %v883 = vmul.f32 %v866, %v835
        %v884 = vmul.f32 %v871, %v836
        %v885 = vmul.f32 %v876, %v837
        %v886 = vadd.f32 %v789, %v878
        %v887 = vadd.f32 %v790, %v879
        %v888 = vadd.f32 %v791, %v880
        %v889 = vadd.f32 %v792, %v881
        %v890 = vadd.f32 %v793, %v882
        %v891 = vadd.f32 %v794, %v883
        %v892 = vadd.f32 %v795, %v884
        %v893 = vadd.f32 %v796, %v885
        %894 = vrot.lane.b32.xlu0 %v726, 2
        %v895 = vpop.permute.xlu0 %894
        %896 = vrot.lane.b32.xlu0 %v729, 2
        %v897 = vpop.permute.xlu0 %896
        %898 = vrot.lane.b32.xlu0 %v732, 2
        %v899 = vpop.permute.xlu0 %898
        %900 = vrot.lane.b32.xlu0 %v735, 2
        %v901 = vpop.permute.xlu0 %900
        %902 = vrot.lane.b32.xlu0 %v738, 2
        %v903 = vpop.permute.xlu0 %902
        %904 = vrot.lane.b32.xlu0 %v741, 2
        %v905 = vpop.permute.xlu0 %904
        %906 = vrot.lane.b32.xlu0 %v744, 2
        %v907 = vpop.permute.xlu0 %906
        %908 = vrot.lane.b32.xlu0 %v747, 2
        %v909 = vpop.permute.xlu0 %908
        %vm918 = vcmask 15360
        %v919 = vsel %vm918, 0.0, %v895
        %v920 = vsel %vm918, 0.0, %v897
        %v921 = vsel %vm918, 0.0, %v899
        %v922 = vsel %vm918, 0.0, %v901
        %v923 = vsel %vm918, 0.0, %v903
        %v924 = vsel %vm918, 0.0, %v905
        %v925 = vsel %vm918, 0.0, %v907
        %v926 = vsel %vm918, 0.0, %v909
        %927 = vset.pattern.permute.xlu0 1
        %928 = vperm.xlu0 %927, %v571
        %v929 = vpop.permute.xlu0 %928
        %931 = vset.pattern.permute.xlu0 1
        %932 = vperm.xlu0 %931, %v572
        %v933 = vpop.permute.xlu0 %932
        %935 = vset.pattern.permute.xlu0 1
        %936 = vperm.xlu0 %935, %v573
        %v937 = vpop.permute.xlu0 %936
        %939 = vset.pattern.permute.xlu0 1
        %940 = vperm.xlu0 %939, %v574
        %v941 = vpop.permute.xlu0 %940
        %943 = vset.pattern.permute.xlu0 1
        %944 = vperm.xlu0 %943, %v575
        %v945 = vpop.permute.xlu0 %944
        %947 = vset.pattern.permute.xlu0 1
        %948 = vperm.xlu0 %947, %v576
        %v949 = vpop.permute.xlu0 %948
        %951 = vset.pattern.permute.xlu0 1
        %952 = vperm.xlu0 %951, %v577
        %v953 = vpop.permute.xlu0 %952
        %955 = vset.pattern.permute.xlu0 1
        %956 = vperm.xlu0 %955, %v578
        %v957 = vpop.permute.xlu0 %956
        %v959 = vmul.f32 %v929, %v919
        %v960 = vmul.f32 %v933, %v920
        %v961 = vmul.f32 %v937, %v921
        %v962 = vmul.f32 %v941, %v922
        %v963 = vmul.f32 %v945, %v923
        %v964 = vmul.f32 %v949, %v924
        %v965 = vmul.f32 %v953, %v925
        %v966 = vmul.f32 %v957, %v926
        %v967 = vadd.f32 %v886, %v959
        %v968 = vadd.f32 %v887, %v960
        %v969 = vadd.f32 %v888, %v961
        %v970 = vadd.f32 %v889, %v962
        %v971 = vadd.f32 %v890, %v963
        %v972 = vadd.f32 %v891, %v964
        %v973 = vadd.f32 %v892, %v965
        %v974 = vadd.f32 %v893, %v966
        %975 = vrot.lane.b32.xlu0 %v726, 1
        %v976 = vpop.permute.xlu0 %975
        %977 = vrot.lane.b32.xlu0 %v729, 1
        %v978 = vpop.permute.xlu0 %977
        %979 = vrot.lane.b32.xlu0 %v732, 1
        %v980 = vpop.permute.xlu0 %979
        %981 = vrot.lane.b32.xlu0 %v735, 1
        %v982 = vpop.permute.xlu0 %981
        %983 = vrot.lane.b32.xlu0 %v738, 1
        %v984 = vpop.permute.xlu0 %983
        %985 = vrot.lane.b32.xlu0 %v741, 1
        %v986 = vpop.permute.xlu0 %985
        %987 = vrot.lane.b32.xlu0 %v744, 1
        %v988 = vpop.permute.xlu0 %987
        %989 = vrot.lane.b32.xlu0 %v747, 1
        %v990 = vpop.permute.xlu0 %989
        %vm999 = vcmask 7168
        %v1000 = vsel %vm999, 0.0, %v976
        %v1001 = vsel %vm999, 0.0, %v978
        %v1002 = vsel %vm999, 0.0, %v980
        %v1003 = vsel %vm999, 0.0, %v982
        %v1004 = vsel %vm999, 0.0, %v984
        %v1005 = vsel %vm999, 0.0, %v986
        %v1006 = vsel %vm999, 0.0, %v988
        %v1007 = vsel %vm999, 0.0, %v990
        %1008 = vset.pattern.permute.xlu0 2
        %1009 = vperm.xlu0 %1008, %v571
        %v1010 = vpop.permute.xlu0 %1009
        %1012 = vset.pattern.permute.xlu0 2
        %1013 = vperm.xlu0 %1012, %v572
        %v1014 = vpop.permute.xlu0 %1013
        %1016 = vset.pattern.permute.xlu0 2
        %1017 = vperm.xlu0 %1016, %v573
        %v1018 = vpop.permute.xlu0 %1017
        %1020 = vset.pattern.permute.xlu0 2
        %1021 = vperm.xlu0 %1020, %v574
        %v1022 = vpop.permute.xlu0 %1021
        %1024 = vset.pattern.permute.xlu0 2
        %1025 = vperm.xlu0 %1024, %v575
        %v1026 = vpop.permute.xlu0 %1025
        %1028 = vset.pattern.permute.xlu0 2
        %1029 = vperm.xlu0 %1028, %v576
        %v1030 = vpop.permute.xlu0 %1029
        %1032 = vset.pattern.permute.xlu0 2
        %1033 = vperm.xlu0 %1032, %v577
        %v1034 = vpop.permute.xlu0 %1033
        %1036 = vset.pattern.permute.xlu0 2
        %1037 = vperm.xlu0 %1036, %v578
        %v1038 = vpop.permute.xlu0 %1037
        %v1040 = vmul.f32 %v1010, %v1000
        %v1041 = vmul.f32 %v1014, %v1001
        %v1042 = vmul.f32 %v1018, %v1002
        %v1043 = vmul.f32 %v1022, %v1003
        %v1044 = vmul.f32 %v1026, %v1004
        %v1045 = vmul.f32 %v1030, %v1005
        %v1046 = vmul.f32 %v1034, %v1006
        %v1047 = vmul.f32 %v1038, %v1007
        %v1048 = vadd.f32 %v967, %v1040
        %v1049 = vadd.f32 %v968, %v1041
        %v1050 = vadd.f32 %v969, %v1042
        %v1051 = vadd.f32 %v970, %v1043
        %v1052 = vadd.f32 %v971, %v1044
        %v1053 = vadd.f32 %v972, %v1045
        %v1054 = vadd.f32 %v973, %v1046
        %v1055 = vadd.f32 %v974, %v1047
        %1056 = vset.pattern.permute.xlu0 3
        %1057 = vperm.xlu0 %1056, %v571
        %v1058 = vpop.permute.xlu0 %1057
        %1060 = vset.pattern.permute.xlu0 3
        %1061 = vperm.xlu0 %1060, %v572
        %v1062 = vpop.permute.xlu0 %1061
        %1064 = vset.pattern.permute.xlu0 3
        %1065 = vperm.xlu0 %1064, %v573
        %v1066 = vpop.permute.xlu0 %1065
        %1068 = vset.pattern.permute.xlu0 3
        %1069 = vperm.xlu0 %1068, %v574
        %v1070 = vpop.permute.xlu0 %1069
        %1072 = vset.pattern.permute.xlu0 3
        %1073 = vperm.xlu0 %1072, %v575
        %v1074 = vpop.permute.xlu0 %1073
        %1076 = vset.pattern.permute.xlu0 3
        %1077 = vperm.xlu0 %1076, %v576
        %v1078 = vpop.permute.xlu0 %1077
        %1080 = vset.pattern.permute.xlu0 3
        %1081 = vperm.xlu0 %1080, %v577
        %v1082 = vpop.permute.xlu0 %1081
        %1084 = vset.pattern.permute.xlu0 3
        %1085 = vperm.xlu0 %1084, %v578
        %v1086 = vpop.permute.xlu0 %1085
        %v1088 = vmul.f32 %v1058, %v726
        %v1089 = vmul.f32 %v1062, %v729
        %v1090 = vmul.f32 %v1066, %v732
        %v1091 = vmul.f32 %v1070, %v735
        %v1092 = vmul.f32 %v1074, %v738
        %v1093 = vmul.f32 %v1078, %v741
        %v1094 = vmul.f32 %v1082, %v744
        %v1095 = vmul.f32 %v1086, %v747
        %v1096 = vadd.f32 %v1048, %v1088
        %v1097 = vadd.f32 %v1049, %v1089
        %v1098 = vadd.f32 %v1050, %v1090
        %v1099 = vadd.f32 %v1051, %v1091
        %v1100 = vadd.f32 %v1052, %v1092
        %v1101 = vadd.f32 %v1053, %v1093
        %v1102 = vadd.f32 %v1054, %v1094
        %v1103 = vadd.f32 %v1055, %v1095
        %1104 = vrot.lane.b32.xlu0 %v726, 127
        %v1105 = vpop.permute.xlu0 %1104
        %1106 = vrot.lane.b32.xlu0 %v729, 127
        %v1107 = vpop.permute.xlu0 %1106
        %1108 = vrot.lane.b32.xlu0 %v732, 127
        %v1109 = vpop.permute.xlu0 %1108
        %1110 = vrot.lane.b32.xlu0 %v735, 127
        %v1111 = vpop.permute.xlu0 %1110
        %1112 = vrot.lane.b32.xlu0 %v738, 127
        %v1113 = vpop.permute.xlu0 %1112
        %1114 = vrot.lane.b32.xlu0 %v741, 127
        %v1115 = vpop.permute.xlu0 %1114
        %1116 = vrot.lane.b32.xlu0 %v744, 127
        %v1117 = vpop.permute.xlu0 %1116
        %1118 = vrot.lane.b32.xlu0 %v747, 127
        %v1119 = vpop.permute.xlu0 %1118
        %vm1128 = vcmask 1039360
        %v1129 = vsel %vm1128, %v1105, 0.0
        %v1130 = vsel %vm1128, %v1107, 0.0
        %v1131 = vsel %vm1128, %v1109, 0.0
        %v1132 = vsel %vm1128, %v1111, 0.0
        %v1133 = vsel %vm1128, %v1113, 0.0
        %v1134 = vsel %vm1128, %v1115, 0.0
        %v1135 = vsel %vm1128, %v1117, 0.0
        %v1136 = vsel %vm1128, %v1119, 0.0
        %1137 = vset.pattern.permute.xlu0 4
        %1138 = vperm.xlu0 %1137, %v571
        %v1139 = vpop.permute.xlu0 %1138
        %1141 = vset.pattern.permute.xlu0 4
        %1142 = vperm.xlu0 %1141, %v572
        %v1143 = vpop.permute.xlu0 %1142
        %1145 = vset.pattern.permute.xlu0 4
        %1146 = vperm.xlu0 %1145, %v573
        %v1147 = vpop.permute.xlu0 %1146
        %1149 = vset.pattern.permute.xlu0 4
        %1150 = vperm.xlu0 %1149, %v574
        %v1151 = vpop.permute.xlu0 %1150
        %1153 = vset.pattern.permute.xlu0 4
        %1154 = vperm.xlu0 %1153, %v575
        %v1155 = vpop.permute.xlu0 %1154
        %1157 = vset.pattern.permute.xlu0 4
        %1158 = vperm.xlu0 %1157, %v576
        %v1159 = vpop.permute.xlu0 %1158
        %1161 = vset.pattern.permute.xlu0 4
        %1162 = vperm.xlu0 %1161, %v577
        %v1163 = vpop.permute.xlu0 %1162
        %1165 = vset.pattern.permute.xlu0 4
        %1166 = vperm.xlu0 %1165, %v578
        %v1167 = vpop.permute.xlu0 %1166
        %v1169 = vmul.f32 %v1139, %v1129
        %v1170 = vmul.f32 %v1143, %v1130
        %v1171 = vmul.f32 %v1147, %v1131
        %v1172 = vmul.f32 %v1151, %v1132
        %v1173 = vmul.f32 %v1155, %v1133
        %v1174 = vmul.f32 %v1159, %v1134
        %v1175 = vmul.f32 %v1163, %v1135
        %v1176 = vmul.f32 %v1167, %v1136
        %v1177 = vadd.f32 %v1096, %v1169
        %v1178 = vadd.f32 %v1097, %v1170
        %v1179 = vadd.f32 %v1098, %v1171
        %v1180 = vadd.f32 %v1099, %v1172
        %v1181 = vadd.f32 %v1100, %v1173
        %v1182 = vadd.f32 %v1101, %v1174
        %v1183 = vadd.f32 %v1102, %v1175
        %v1184 = vadd.f32 %v1103, %v1176
        %1185 = vrot.lane.b32.xlu0 %v726, 126
        %v1186 = vpop.permute.xlu0 %1185
        %1187 = vrot.lane.b32.xlu0 %v729, 126
        %v1188 = vpop.permute.xlu0 %1187
        %1189 = vrot.lane.b32.xlu0 %v732, 126
        %v1190 = vpop.permute.xlu0 %1189
        %1191 = vrot.lane.b32.xlu0 %v735, 126
        %v1192 = vpop.permute.xlu0 %1191
        %1193 = vrot.lane.b32.xlu0 %v738, 126
        %v1194 = vpop.permute.xlu0 %1193
        %1195 = vrot.lane.b32.xlu0 %v741, 126
        %v1196 = vpop.permute.xlu0 %1195
        %1197 = vrot.lane.b32.xlu0 %v744, 126
        %v1198 = vpop.permute.xlu0 %1197
        %1199 = vrot.lane.b32.xlu0 %v747, 126
        %v1200 = vpop.permute.xlu0 %1199
        %vm1209 = vcmask 1031168
        %v1210 = vsel %vm1209, %v1186, 0.0
        %v1211 = vsel %vm1209, %v1188, 0.0
        %v1212 = vsel %vm1209, %v1190, 0.0
        %v1213 = vsel %vm1209, %v1192, 0.0
        %v1214 = vsel %vm1209, %v1194, 0.0
        %v1215 = vsel %vm1209, %v1196, 0.0
        %v1216 = vsel %vm1209, %v1198, 0.0
        %v1217 = vsel %vm1209, %v1200, 0.0
        %1218 = vset.pattern.permute.xlu0 5
        %1219 = vperm.xlu0 %1218, %v571
        %v1220 = vpop.permute.xlu0 %1219
        %1222 = vset.pattern.permute.xlu0 5
        %1223 = vperm.xlu0 %1222, %v572
        %v1224 = vpop.permute.xlu0 %1223
        %1226 = vset.pattern.permute.xlu0 5
        %1227 = vperm.xlu0 %1226, %v573
        %v1228 = vpop.permute.xlu0 %1227
        %1230 = vset.pattern.permute.xlu0 5
        %1231 = vperm.xlu0 %1230, %v574
        %v1232 = vpop.permute.xlu0 %1231
        %1234 = vset.pattern.permute.xlu0 5
        %1235 = vperm.xlu0 %1234, %v575
        %v1236 = vpop.permute.xlu0 %1235
        %1238 = vset.pattern.permute.xlu0 5
        %1239 = vperm.xlu0 %1238, %v576
        %v1240 = vpop.permute.xlu0 %1239
        %1242 = vset.pattern.permute.xlu0 5
        %1243 = vperm.xlu0 %1242, %v577
        %v1244 = vpop.permute.xlu0 %1243
        %1246 = vset.pattern.permute.xlu0 5
        %1247 = vperm.xlu0 %1246, %v578
        %v1248 = vpop.permute.xlu0 %1247
        %v1250 = vmul.f32 %v1220, %v1210
        %v1251 = vmul.f32 %v1224, %v1211
        %v1252 = vmul.f32 %v1228, %v1212
        %v1253 = vmul.f32 %v1232, %v1213
        %v1254 = vmul.f32 %v1236, %v1214
        %v1255 = vmul.f32 %v1240, %v1215
        %v1256 = vmul.f32 %v1244, %v1216
        %v1257 = vmul.f32 %v1248, %v1217
        %v1258 = vadd.f32 %v1177, %v1250
        %v1259 = vadd.f32 %v1178, %v1251
        %v1260 = vadd.f32 %v1179, %v1252
        %v1261 = vadd.f32 %v1180, %v1253
        %v1262 = vadd.f32 %v1181, %v1254
        %v1263 = vadd.f32 %v1182, %v1255
        %v1264 = vadd.f32 %v1183, %v1256
        %v1265 = vadd.f32 %v1184, %v1257
        %1266 = vrot.lane.b32.xlu0 %v726, 125
        %v1267 = vpop.permute.xlu0 %1266
        %1268 = vrot.lane.b32.xlu0 %v729, 125
        %v1269 = vpop.permute.xlu0 %1268
        %1270 = vrot.lane.b32.xlu0 %v732, 125
        %v1271 = vpop.permute.xlu0 %1270
        %1272 = vrot.lane.b32.xlu0 %v735, 125
        %v1273 = vpop.permute.xlu0 %1272
        %1274 = vrot.lane.b32.xlu0 %v738, 125
        %v1275 = vpop.permute.xlu0 %1274
        %1276 = vrot.lane.b32.xlu0 %v741, 125
        %v1277 = vpop.permute.xlu0 %1276
        %1278 = vrot.lane.b32.xlu0 %v744, 125
        %v1279 = vpop.permute.xlu0 %1278
        %1280 = vrot.lane.b32.xlu0 %v747, 125
        %v1281 = vpop.permute.xlu0 %1280
        %vm1290 = vcmask 1022976
        %v1291 = vsel %vm1290, %v1267, 0.0
        %v1292 = vsel %vm1290, %v1269, 0.0
        %v1293 = vsel %vm1290, %v1271, 0.0
        %v1294 = vsel %vm1290, %v1273, 0.0
        %v1295 = vsel %vm1290, %v1275, 0.0
        %v1296 = vsel %vm1290, %v1277, 0.0
        %v1297 = vsel %vm1290, %v1279, 0.0
        %v1298 = vsel %vm1290, %v1281, 0.0
        %1299 = vset.pattern.permute.xlu0 6
        %1300 = vperm.xlu0 %1299, %v571
        %v1301 = vpop.permute.xlu0 %1300
        %1303 = vset.pattern.permute.xlu0 6
        %1304 = vperm.xlu0 %1303, %v572
        %v1305 = vpop.permute.xlu0 %1304
        %1307 = vset.pattern.permute.xlu0 6
        %1308 = vperm.xlu0 %1307, %v573
        %v1309 = vpop.permute.xlu0 %1308
        %1311 = vset.pattern.permute.xlu0 6
        %1312 = vperm.xlu0 %1311, %v574
        %v1313 = vpop.permute.xlu0 %1312
        %1315 = vset.pattern.permute.xlu0 6
        %1316 = vperm.xlu0 %1315, %v575
        %v1317 = vpop.permute.xlu0 %1316
        %1319 = vset.pattern.permute.xlu0 6
        %1320 = vperm.xlu0 %1319, %v576
        %v1321 = vpop.permute.xlu0 %1320
        %1323 = vset.pattern.permute.xlu0 6
        %1324 = vperm.xlu0 %1323, %v577
        %v1325 = vpop.permute.xlu0 %1324
        %1327 = vset.pattern.permute.xlu0 6
        %1328 = vperm.xlu0 %1327, %v578
        %v1329 = vpop.permute.xlu0 %1328
        %v1331 = vmul.f32 %v1301, %v1291
        %v1332 = vmul.f32 %v1305, %v1292
        %v1333 = vmul.f32 %v1309, %v1293
        %v1334 = vmul.f32 %v1313, %v1294
        %v1335 = vmul.f32 %v1317, %v1295
        %v1336 = vmul.f32 %v1321, %v1296
        %v1337 = vmul.f32 %v1325, %v1297
        %v1338 = vmul.f32 %v1329, %v1298
        %v1339 = vadd.f32 %v1258, %v1331
        %v1340 = vadd.f32 %v1259, %v1332
        %v1341 = vadd.f32 %v1260, %v1333
        %v1342 = vadd.f32 %v1261, %v1334
        %v1343 = vadd.f32 %v1262, %v1335
        %v1344 = vadd.f32 %v1263, %v1336
        %v1345 = vadd.f32 %v1264, %v1337
        %v1346 = vadd.f32 %v1265, %v1338
        %v1347 = vmul.f32 %v1339, 0.5
        %v1348 = vmul.f32 %v1340, 0.5
        %v1349 = vmul.f32 %v1341, 0.5
        %v1350 = vmul.f32 %v1342, 0.5
        %v1351 = vmul.f32 %v1343, 0.5
        %v1352 = vmul.f32 %v1344, 0.5
        %v1353 = vmul.f32 %v1345, 0.5
        %v1354 = vmul.f32 %v1346, 0.5
        %v1355 = vmul.f32 %v642, %v1347
        %1357 = vset.pattern.permute.xlu0 0
        %1358 = vperm.xlu0 %1357, %v595
        %v1359 = vpop.permute.xlu0 %1358
        %v1362 = vsel %vm918, %v587, 0
        %vm1364 = vcmask 1041408
        %v1366 = vsel %vm1364, %v1355, 0
        %1368 = vmatpush.msra.mxu0 0.0
        %1369 = vmatpush.msra.mxu0 0.0
        %1370 = vmatpush.msra.mxu0 0.0
        %1371 = vmatpush.msra.mxu0 0.0
        %1372 = vmatpush.msra.mxu0 0.0
        %1373 = vmatpush.msra.mxu0 0.0
        %1374 = vmatpush.msra.mxu0 0.0
        %1375 = vmatpush.msra.mxu0 0.0
        %1376 = vmatpush.msra.mxu0 0.0
        %1377 = vmatpush.msra.mxu0 0.0
        %1378 = vmatpush.msra.mxu0 0.0
        %1379 = vmatpush.msra.mxu0 0.0
        %1380 = vmatpush.msra.mxu0 0.0
        %1381 = vmatpush.msra.mxu0 0.0
        %1382 = vmatpush.msra.mxu0 0.0
        %1383 = vmatpush.msra.mxu0 %v1366
        %1384 = vmatmul.f32.gmra.mxu0 %v1362
        %v1385 = vpop.f32.mrf.mxu0
        %v1386 = vadd.f32 %v1359, %v1385
        %1387 = vdwg.mxu0
        %v1389 = vrot.slane %v1347, 2
        %v1391 = vmul.f32 %v1386, %v1389
        %1393 = vset.pattern.permute.xlu0 0
        %1394 = vperm.xlu0 %1393, %v596
        %v1395 = vpop.permute.xlu0 %1394
        %vm1397 = vcmask 31744
        %v1399 = vsel %vm1397, %v588, 0
        %vm1401 = vcmask 1043456
        %v1403 = vsel %vm1401, %v1391, 0
        %1405 = vmatpush.msra.mxu0 0.0
        %1406 = vmatpush.msra.mxu0 0.0
        %1407 = vmatpush.msra.mxu0 0.0
        %1408 = vmatpush.msra.mxu0 0.0
        %1409 = vmatpush.msra.mxu0 0.0
        %1410 = vmatpush.msra.mxu0 0.0
        %1411 = vmatpush.msra.mxu0 0.0
        %1412 = vmatpush.msra.mxu0 0.0
        %1413 = vmatpush.msra.mxu0 0.0
        %1414 = vmatpush.msra.mxu0 0.0
        %1415 = vmatpush.msra.mxu0 0.0
        %1416 = vmatpush.msra.mxu0 0.0
        %1417 = vmatpush.msra.mxu0 0.0
        %1418 = vmatpush.msra.mxu0 0.0
        %1419 = vmatpush.msra.mxu0 0.0
        %1420 = vmatpush.msra.mxu0 %v1403
        %1421 = vmatmul.f32.gmra.mxu0 %v1399
        %v1422 = vpop.f32.mrf.mxu0
        %v1423 = vadd.f32 %v1395, %v1422
        %1424 = vdwg.mxu0
        %v1426 = vrot.slane %v1347, 6
        %v1427 = vrot.slane %v1348, 6
        %v1428 = vsel %vm1364, %v1426, %v1427
        %v1430 = vmul.f32 %v1423, %v1428
        %1432 = vset.pattern.permute.xlu0 0
        %1433 = vperm.xlu0 %1432, %v597
        %v1434 = vpop.permute.xlu0 %1433
        %1437 = vset.pattern.permute.xlu0 0
        %1438 = vperm.xlu0 %1437, %v598
        %v1439 = vpop.permute.xlu0 %1438
        %vm1441 = vcmask 64512
        %v1443 = vsel %vm1441, %v589, 0
        %v1446 = vsel %vm1441, %v590, 0
        %1448 = vmatpush.msra.mxu0 0.0
        %1449 = vmatpush.msra.mxu0 0.0
        %1450 = vmatpush.msra.mxu0 0.0
        %1451 = vmatpush.msra.mxu0 0.0
        %1452 = vmatpush.msra.mxu0 0.0
        %1453 = vmatpush.msra.mxu0 0.0
        %1454 = vmatpush.msra.mxu0 0.0
        %1455 = vmatpush.msra.mxu0 0.0
        %1456 = vmatpush.msra.mxu0 0.0
        %1457 = vmatpush.msra.mxu0 0.0
        %1458 = vmatpush.msra.mxu0 0.0
        %1459 = vmatpush.msra.mxu0 0.0
        %1460 = vmatpush.msra.mxu0 0.0
        %1461 = vmatpush.msra.mxu0 0.0
        %1462 = vmatpush.msra.mxu0 0.0
        %1463 = vmatpush.msra.mxu0 %v1430
        %1464 = vmatmul.f32.gmra.mxu0 %v1443
        %v1465 = vpop.f32.mrf.mxu0
        %v1466 = vadd.f32 %v1434, %v1465
        %1467 = vmatmul.f32.gmra.mxu0 %v1446
        %v1468 = vpop.f32.mrf.mxu0
        %v1469 = vadd.f32 %v1439, %v1468
        %1470 = vdwg.mxu0
        %v1473 = vrot.slane %v1349, 6
        %v1474 = vsel %vm1364, %v1427, %v1473
        %v1475 = vrot.slane %v1350, 6
        %v1476 = vsel %vm1364, %v1473, %v1475
        %v1479 = vmul.f32 %v1466, %v1474
        %v1480 = vmul.f32 %v1469, %v1476
        %1482 = vset.pattern.permute.xlu0 0
        %1483 = vperm.xlu0 %1482, %v599
        %v1484 = vpop.permute.xlu0 %1483
        %1487 = vset.pattern.permute.xlu0 0
        %1488 = vperm.xlu0 %1487, %v600
        %v1489 = vpop.permute.xlu0 %1488
        %1492 = vset.pattern.permute.xlu0 0
        %1493 = vperm.xlu0 %1492, %v601
        %v1494 = vpop.permute.xlu0 %1493
        %1497 = vset.pattern.permute.xlu0 0
        %1498 = vperm.xlu0 %1497, %v602
        %v1499 = vpop.permute.xlu0 %1498
        %vm1501 = vcmask 130048
        %v1503 = vsel %vm1501, %v591, 0
        %v1506 = vsel %vm1501, %v592, 0
        %v1509 = vsel %vm1501, %v593, 0
        %v1512 = vsel %vm1501, %v594, 0
        %1514 = vmatpush.msra.mxu0 0.0
        %1515 = vmatpush.msra.mxu0 0.0
        %1516 = vmatpush.msra.mxu0 0.0
        %1517 = vmatpush.msra.mxu0 0.0
        %1518 = vmatpush.msra.mxu0 0.0
        %1519 = vmatpush.msra.mxu0 0.0
        %1520 = vmatpush.msra.mxu0 0.0
        %1521 = vmatpush.msra.mxu0 0.0
        %1522 = vmatpush.msra.mxu0 0.0
        %1523 = vmatpush.msra.mxu0 0.0
        %1524 = vmatpush.msra.mxu0 0.0
        %1525 = vmatpush.msra.mxu0 0.0
        %1526 = vmatpush.msra.mxu0 0.0
        %1527 = vmatpush.msra.mxu0 0.0
        %1528 = vmatpush.msra.mxu0 %v1480
        %1529 = vmatpush.msra.mxu0 %v1479
        %1530 = vmatmul.f32.gmra.mxu0 %v1503
        %v1531 = vpop.f32.mrf.mxu0
        %v1532 = vadd.f32 %v1484, %v1531
        %1533 = vmatmul.f32.gmra.mxu0 %v1506
        %v1534 = vpop.f32.mrf.mxu0
        %v1535 = vadd.f32 %v1489, %v1534
        %1536 = vmatmul.f32.gmra.mxu0 %v1509
        %v1537 = vpop.f32.mrf.mxu0
        %v1538 = vadd.f32 %v1494, %v1537
        %1539 = vmatmul.f32.gmra.mxu0 %v1512
        %v1540 = vpop.f32.mrf.mxu0
        %v1541 = vadd.f32 %v1499, %v1540
        %1542 = vdwg.mxu0
        %v1547 = vrot.slane %v1351, 6
        %v1548 = vsel %vm1364, %v1475, %v1547
        %v1549 = vrot.slane %v1352, 6
        %v1550 = vsel %vm1364, %v1547, %v1549
        %v1551 = vrot.slane %v1353, 6
        %v1552 = vsel %vm1364, %v1549, %v1551
        %v1553 = vrot.slane %v1354, 6
        %v1554 = vsel %vm1364, %v1551, %v1553
        %v1559 = vmul.f32 %v1532, %v1548
        %v1560 = vmul.f32 %v1535, %v1550
        %v1561 = vmul.f32 %v1538, %v1552
        %v1562 = vmul.f32 %v1541, %v1554
        %1564 = vset.pattern.permute.xlu0 0
        %1565 = vperm.xlu0 %1564, %v607
        %v1566 = vpop.permute.xlu0 %1565
        %1569 = vset.pattern.permute.xlu0 0
        %1570 = vperm.xlu0 %1569, %v608
        %v1571 = vpop.permute.xlu0 %1570
        %1574 = vset.pattern.permute.xlu0 0
        %1575 = vperm.xlu0 %1574, %v609
        %v1576 = vpop.permute.xlu0 %1575
        %1579 = vset.pattern.permute.xlu0 0
        %1580 = vperm.xlu0 %1579, %v610
        %v1581 = vpop.permute.xlu0 %1580
        %v1584 = vsel %vm620, %v603, 0
        %v1587 = vsel %vm620, %v604, 0
        %v1590 = vsel %vm620, %v605, 0
        %v1593 = vsel %vm620, %v606, 0
        %1595 = vmatpush.msra.mxu0 0.0
        %1596 = vmatpush.msra.mxu0 0.0
        %1597 = vmatpush.msra.mxu0 0.0
        %1598 = vmatpush.msra.mxu0 0.0
        %1599 = vmatpush.msra.mxu0 0.0
        %1600 = vmatpush.msra.mxu0 0.0
        %1601 = vmatpush.msra.mxu0 0.0
        %1602 = vmatpush.msra.mxu0 0.0
        %1603 = vmatpush.msra.mxu0 0.0
        %1604 = vmatpush.msra.mxu0 0.0
        %1605 = vmatpush.msra.mxu0 0.0
        %1606 = vmatpush.msra.mxu0 0.0
        %1607 = vmatpush.msra.mxu0 %v1562
        %1608 = vmatpush.msra.mxu0 %v1561
        %1609 = vmatpush.msra.mxu0 %v1560
        %1610 = vmatpush.msra.mxu0 %v1559
        %1611 = vmatmul.f32.gmra.mxu0 %v1584
        %v1612 = vpop.f32.mrf.mxu0
        %v1613 = vadd.f32 %v1566, %v1612
        %1614 = vmatmul.f32.gmra.mxu0 %v1587
        %v1615 = vpop.f32.mrf.mxu0
        %v1616 = vadd.f32 %v1571, %v1615
        %1617 = vmatmul.f32.gmra.mxu0 %v1590
        %v1618 = vpop.f32.mrf.mxu0
        %v1619 = vadd.f32 %v1576, %v1618
        %1620 = vmatmul.f32.gmra.mxu0 %v1593
        %v1621 = vpop.f32.mrf.mxu0
        %v1622 = vadd.f32 %v1581, %v1621
        %1623 = vdwg.mxu0
        %1624 = vst [vmem:[%s544] sm:$0xff] %v1613
        %1625 = vst [vmem:[%s544 + $0x8] sm:$0xff] %v1616
        %1626 = vst [vmem:[%s544 + $0x10] sm:$0xff] %v1619
        %1627 = vst [vmem:[%s544 + $0x18] sm:$0xff] %v1622
        %s1628 = scalar_lea.vmem %s550, 32
        %v1629 = vld [vmem:[%s1628] sm:$0xff]
        %v1630 = vld [vmem:[%s1628 + $0x8] sm:$0xff]
        %v1631 = vld [vmem:[%s1628 + $0x10] sm:$0xff]
        %v1632 = vld [vmem:[%s1628 + $0x18] sm:$0xff]
        %1633 = vmatpush.msra.mxu0 0.0
        %1634 = vmatpush.msra.mxu0 0.0
        %1635 = vmatpush.msra.mxu0 0.0
        %1636 = vmatpush.msra.mxu0 0.0
        %1637 = vmatpush.msra.mxu0 0.0
        %1638 = vmatpush.msra.mxu0 0.0
        %1639 = vmatpush.msra.mxu0 0.0
        %1640 = vmatpush.msra.mxu0 0.0
        %1641 = vmatpush.msra.mxu0 0.0
        %1642 = vmatpush.msra.mxu0 0.0
        %1643 = vmatpush.msra.mxu0 0.0
        %1644 = vmatpush.msra.mxu0 0.0
        %1645 = vmatpush.msra.mxu0 %v1632
        %1646 = vmatpush.msra.mxu0 %v1631
        %1647 = vmatpush.msra.mxu0 %v1630
        %1648 = vmatpush.msra.mxu0 %v1629
        %1649 = vmatmul.f32.gmra.mxu0 %v622
        %v1650 = vpop.f32.mrf.mxu0
        %v1651 = vadd.f32 %v618, %v1650
        %1652 = vdwg.mxu0
        %1653 = vmatpush.msra.mxu0 0.0
        %1654 = vmatpush.msra.mxu0 0.0
        %1655 = vmatpush.msra.mxu0 0.0
        %1656 = vmatpush.msra.mxu0 0.0
        %1657 = vmatpush.msra.mxu0 0.0
        %1658 = vmatpush.msra.mxu0 0.0
        %1659 = vmatpush.msra.mxu0 0.0
        %1660 = vmatpush.msra.mxu0 0.0
        %1661 = vmatpush.msra.mxu0 0.0
        %1662 = vmatpush.msra.mxu0 0.0
        %1663 = vmatpush.msra.mxu0 0.0
        %1664 = vmatpush.msra.mxu0 0.0
        %1665 = vmatpush.msra.mxu0 %v1632
        %1666 = vmatpush.msra.mxu0 %v1631
        %1667 = vmatpush.msra.mxu0 %v1630
        %1668 = vmatpush.msra.mxu0 %v1629
        %1669 = vmatmul.f32.gmra.mxu0 %v685
        %v1670 = vpop.f32.mrf.mxu0
        %v1671 = vadd.f32 %v647, %v1670
        %1672 = vmatmul.f32.gmra.mxu0 %v688
        %v1673 = vpop.f32.mrf.mxu0
        %v1674 = vadd.f32 %v652, %v1673
        %1675 = vmatmul.f32.gmra.mxu0 %v691
        %v1676 = vpop.f32.mrf.mxu0
        %v1677 = vadd.f32 %v657, %v1676
        %1678 = vmatmul.f32.gmra.mxu0 %v694
        %v1679 = vpop.f32.mrf.mxu0
        %v1680 = vadd.f32 %v662, %v1679
        %1681 = vmatmul.f32.gmra.mxu0 %v697
        %v1682 = vpop.f32.mrf.mxu0
        %v1683 = vadd.f32 %v667, %v1682
        %1684 = vmatmul.f32.gmra.mxu0 %v700
        %v1685 = vpop.f32.mrf.mxu0
        %v1686 = vadd.f32 %v672, %v1685
        %1687 = vmatmul.f32.gmra.mxu0 %v703
        %v1688 = vpop.f32.mrf.mxu0
        %v1689 = vadd.f32 %v677, %v1688
        %1690 = vmatmul.f32.gmra.mxu0 %v706
        %v1691 = vpop.f32.mrf.mxu0
        %v1692 = vadd.f32 %v682, %v1691
        %1693 = vdwg.mxu0
        %1702 = vrot.lane.b32.xlu0 %v1671, 3
        %v1703 = vpop.permute.xlu0 %1702
        %1704 = vrot.lane.b32.xlu0 %v1674, 3
        %v1705 = vpop.permute.xlu0 %1704
        %1706 = vrot.lane.b32.xlu0 %v1677, 3
        %v1707 = vpop.permute.xlu0 %1706
        %1708 = vrot.lane.b32.xlu0 %v1680, 3
        %v1709 = vpop.permute.xlu0 %1708
        %1710 = vrot.lane.b32.xlu0 %v1683, 3
        %v1711 = vpop.permute.xlu0 %1710
        %1712 = vrot.lane.b32.xlu0 %v1686, 3
        %v1713 = vpop.permute.xlu0 %1712
        %1714 = vrot.lane.b32.xlu0 %v1689, 3
        %v1715 = vpop.permute.xlu0 %1714
        %1716 = vrot.lane.b32.xlu0 %v1692, 3
        %v1717 = vpop.permute.xlu0 %1716
        %v1726 = vsel %vm829, 0.0, %v1703
        %v1727 = vsel %vm829, 0.0, %v1705
        %v1728 = vsel %vm829, 0.0, %v1707
        %v1729 = vsel %vm829, 0.0, %v1709
        %v1730 = vsel %vm829, 0.0, %v1711
        %v1731 = vsel %vm829, 0.0, %v1713
        %v1732 = vsel %vm829, 0.0, %v1715
        %v1733 = vsel %vm829, 0.0, %v1717
        %v1734 = vmul.f32 %v841, %v1726
        %v1735 = vmul.f32 %v846, %v1727
        %v1736 = vmul.f32 %v851, %v1728
        %v1737 = vmul.f32 %v856, %v1729
        %v1738 = vmul.f32 %v861, %v1730
        %v1739 = vmul.f32 %v866, %v1731
        %v1740 = vmul.f32 %v871, %v1732
        %v1741 = vmul.f32 %v876, %v1733
        %v1742 = vadd.f32 %v789, %v1734
        %v1743 = vadd.f32 %v790, %v1735
        %v1744 = vadd.f32 %v791, %v1736
        %v1745 = vadd.f32 %v792, %v1737
        %v1746 = vadd.f32 %v793, %v1738
        %v1747 = vadd.f32 %v794, %v1739
        %v1748 = vadd.f32 %v795, %v1740
        %v1749 = vadd.f32 %v796, %v1741
        %1750 = vrot.lane.b32.xlu0 %v1671, 2
        %v1751 = vpop.permute.xlu0 %1750
        %1752 = vrot.lane.b32.xlu0 %v1674, 2
        %v1753 = vpop.permute.xlu0 %1752
        %1754 = vrot.lane.b32.xlu0 %v1677, 2
        %v1755 = vpop.permute.xlu0 %1754
        %1756 = vrot.lane.b32.xlu0 %v1680, 2
        %v1757 = vpop.permute.xlu0 %1756
        %1758 = vrot.lane.b32.xlu0 %v1683, 2
        %v1759 = vpop.permute.xlu0 %1758
        %1760 = vrot.lane.b32.xlu0 %v1686, 2
        %v1761 = vpop.permute.xlu0 %1760
        %1762 = vrot.lane.b32.xlu0 %v1689, 2
        %v1763 = vpop.permute.xlu0 %1762
        %1764 = vrot.lane.b32.xlu0 %v1692, 2
        %v1765 = vpop.permute.xlu0 %1764
        %v1774 = vsel %vm918, 0.0, %v1751
        %v1775 = vsel %vm918, 0.0, %v1753
        %v1776 = vsel %vm918, 0.0, %v1755
        %v1777 = vsel %vm918, 0.0, %v1757
        %v1778 = vsel %vm918, 0.0, %v1759
        %v1779 = vsel %vm918, 0.0, %v1761
        %v1780 = vsel %vm918, 0.0, %v1763
        %v1781 = vsel %vm918, 0.0, %v1765
        %v1782 = vmul.f32 %v929, %v1774
        %v1783 = vmul.f32 %v933, %v1775
        %v1784 = vmul.f32 %v937, %v1776
        %v1785 = vmul.f32 %v941, %v1777
        %v1786 = vmul.f32 %v945, %v1778
        %v1787 = vmul.f32 %v949, %v1779
        %v1788 = vmul.f32 %v953, %v1780
        %v1789 = vmul.f32 %v957, %v1781
        %v1790 = vadd.f32 %v1742, %v1782
        %v1791 = vadd.f32 %v1743, %v1783
        %v1792 = vadd.f32 %v1744, %v1784
        %v1793 = vadd.f32 %v1745, %v1785
        %v1794 = vadd.f32 %v1746, %v1786
        %v1795 = vadd.f32 %v1747, %v1787
        %v1796 = vadd.f32 %v1748, %v1788
        %v1797 = vadd.f32 %v1749, %v1789
        %1798 = vrot.lane.b32.xlu0 %v1671, 1
        %v1799 = vpop.permute.xlu0 %1798
        %1800 = vrot.lane.b32.xlu0 %v1674, 1
        %v1801 = vpop.permute.xlu0 %1800
        %1802 = vrot.lane.b32.xlu0 %v1677, 1
        %v1803 = vpop.permute.xlu0 %1802
        %1804 = vrot.lane.b32.xlu0 %v1680, 1
        %v1805 = vpop.permute.xlu0 %1804
        %1806 = vrot.lane.b32.xlu0 %v1683, 1
        %v1807 = vpop.permute.xlu0 %1806
        %1808 = vrot.lane.b32.xlu0 %v1686, 1
        %v1809 = vpop.permute.xlu0 %1808
        %1810 = vrot.lane.b32.xlu0 %v1689, 1
        %v1811 = vpop.permute.xlu0 %1810
        %1812 = vrot.lane.b32.xlu0 %v1692, 1
        %v1813 = vpop.permute.xlu0 %1812
        %v1822 = vsel %vm999, 0.0, %v1799
        %v1823 = vsel %vm999, 0.0, %v1801
        %v1824 = vsel %vm999, 0.0, %v1803
        %v1825 = vsel %vm999, 0.0, %v1805
        %v1826 = vsel %vm999, 0.0, %v1807
        %v1827 = vsel %vm999, 0.0, %v1809
        %v1828 = vsel %vm999, 0.0, %v1811
        %v1829 = vsel %vm999, 0.0, %v1813
        %v1830 = vmul.f32 %v1010, %v1822
        %v1831 = vmul.f32 %v1014, %v1823
        %v1832 = vmul.f32 %v1018, %v1824
        %v1833 = vmul.f32 %v1022, %v1825
        %v1834 = vmul.f32 %v1026, %v1826
        %v1835 = vmul.f32 %v1030, %v1827
        %v1836 = vmul.f32 %v1034, %v1828
        %v1837 = vmul.f32 %v1038, %v1829
        %v1838 = vadd.f32 %v1790, %v1830
        %v1839 = vadd.f32 %v1791, %v1831
        %v1840 = vadd.f32 %v1792, %v1832
        %v1841 = vadd.f32 %v1793, %v1833
        %v1842 = vadd.f32 %v1794, %v1834
        %v1843 = vadd.f32 %v1795, %v1835
        %v1844 = vadd.f32 %v1796, %v1836
        %v1845 = vadd.f32 %v1797, %v1837
        %v1846 = vmul.f32 %v1058, %v1671
        %v1847 = vmul.f32 %v1062, %v1674
        %v1848 = vmul.f32 %v1066, %v1677
        %v1849 = vmul.f32 %v1070, %v1680
        %v1850 = vmul.f32 %v1074, %v1683
        %v1851 = vmul.f32 %v1078, %v1686
        %v1852 = vmul.f32 %v1082, %v1689
        %v1853 = vmul.f32 %v1086, %v1692
        %v1854 = vadd.f32 %v1838, %v1846
        %v1855 = vadd.f32 %v1839, %v1847
        %v1856 = vadd.f32 %v1840, %v1848
        %v1857 = vadd.f32 %v1841, %v1849
        %v1858 = vadd.f32 %v1842, %v1850
        %v1859 = vadd.f32 %v1843, %v1851
        %v1860 = vadd.f32 %v1844, %v1852
        %v1861 = vadd.f32 %v1845, %v1853
        %1862 = vrot.lane.b32.xlu0 %v1671, 127
        %v1863 = vpop.permute.xlu0 %1862
        %1864 = vrot.lane.b32.xlu0 %v1674, 127
        %v1865 = vpop.permute.xlu0 %1864
        %1866 = vrot.lane.b32.xlu0 %v1677, 127
        %v1867 = vpop.permute.xlu0 %1866
        %1868 = vrot.lane.b32.xlu0 %v1680, 127
        %v1869 = vpop.permute.xlu0 %1868
        %1870 = vrot.lane.b32.xlu0 %v1683, 127
        %v1871 = vpop.permute.xlu0 %1870
        %1872 = vrot.lane.b32.xlu0 %v1686, 127
        %v1873 = vpop.permute.xlu0 %1872
        %1874 = vrot.lane.b32.xlu0 %v1689, 127
        %v1875 = vpop.permute.xlu0 %1874
        %1876 = vrot.lane.b32.xlu0 %v1692, 127
        %v1877 = vpop.permute.xlu0 %1876
        %v1886 = vsel %vm1128, %v1863, 0.0
        %v1887 = vsel %vm1128, %v1865, 0.0
        %v1888 = vsel %vm1128, %v1867, 0.0
        %v1889 = vsel %vm1128, %v1869, 0.0
        %v1890 = vsel %vm1128, %v1871, 0.0
        %v1891 = vsel %vm1128, %v1873, 0.0
        %v1892 = vsel %vm1128, %v1875, 0.0
        %v1893 = vsel %vm1128, %v1877, 0.0
        %v1894 = vmul.f32 %v1139, %v1886
        %v1895 = vmul.f32 %v1143, %v1887
        %v1896 = vmul.f32 %v1147, %v1888
        %v1897 = vmul.f32 %v1151, %v1889
        %v1898 = vmul.f32 %v1155, %v1890
        %v1899 = vmul.f32 %v1159, %v1891
        %v1900 = vmul.f32 %v1163, %v1892
        %v1901 = vmul.f32 %v1167, %v1893
        %v1902 = vadd.f32 %v1854, %v1894
        %v1903 = vadd.f32 %v1855, %v1895
        %v1904 = vadd.f32 %v1856, %v1896
        %v1905 = vadd.f32 %v1857, %v1897
        %v1906 = vadd.f32 %v1858, %v1898
        %v1907 = vadd.f32 %v1859, %v1899
        %v1908 = vadd.f32 %v1860, %v1900
        %v1909 = vadd.f32 %v1861, %v1901
        %1910 = vrot.lane.b32.xlu0 %v1671, 126
        %v1911 = vpop.permute.xlu0 %1910
        %1912 = vrot.lane.b32.xlu0 %v1674, 126
        %v1913 = vpop.permute.xlu0 %1912
        %1914 = vrot.lane.b32.xlu0 %v1677, 126
        %v1915 = vpop.permute.xlu0 %1914
        %1916 = vrot.lane.b32.xlu0 %v1680, 126
        %v1917 = vpop.permute.xlu0 %1916
        %1918 = vrot.lane.b32.xlu0 %v1683, 126
        %v1919 = vpop.permute.xlu0 %1918
        %1920 = vrot.lane.b32.xlu0 %v1686, 126
        %v1921 = vpop.permute.xlu0 %1920
        %1922 = vrot.lane.b32.xlu0 %v1689, 126
        %v1923 = vpop.permute.xlu0 %1922
        %1924 = vrot.lane.b32.xlu0 %v1692, 126
        %v1925 = vpop.permute.xlu0 %1924
        %v1934 = vsel %vm1209, %v1911, 0.0
        %v1935 = vsel %vm1209, %v1913, 0.0
        %v1936 = vsel %vm1209, %v1915, 0.0
        %v1937 = vsel %vm1209, %v1917, 0.0
        %v1938 = vsel %vm1209, %v1919, 0.0
        %v1939 = vsel %vm1209, %v1921, 0.0
        %v1940 = vsel %vm1209, %v1923, 0.0
        %v1941 = vsel %vm1209, %v1925, 0.0
        %v1942 = vmul.f32 %v1220, %v1934
        %v1943 = vmul.f32 %v1224, %v1935
        %v1944 = vmul.f32 %v1228, %v1936
        %v1945 = vmul.f32 %v1232, %v1937
        %v1946 = vmul.f32 %v1236, %v1938
        %v1947 = vmul.f32 %v1240, %v1939
        %v1948 = vmul.f32 %v1244, %v1940
        %v1949 = vmul.f32 %v1248, %v1941
        %v1950 = vadd.f32 %v1902, %v1942
        %v1951 = vadd.f32 %v1903, %v1943
        %v1952 = vadd.f32 %v1904, %v1944
        %v1953 = vadd.f32 %v1905, %v1945
        %v1954 = vadd.f32 %v1906, %v1946
        %v1955 = vadd.f32 %v1907, %v1947
        %v1956 = vadd.f32 %v1908, %v1948
        %v1957 = vadd.f32 %v1909, %v1949
        %1958 = vrot.lane.b32.xlu0 %v1671, 125
        %v1959 = vpop.permute.xlu0 %1958
        %1960 = vrot.lane.b32.xlu0 %v1674, 125
        %v1961 = vpop.permute.xlu0 %1960
        %1962 = vrot.lane.b32.xlu0 %v1677, 125
        %v1963 = vpop.permute.xlu0 %1962
        %1964 = vrot.lane.b32.xlu0 %v1680, 125
        %v1965 = vpop.permute.xlu0 %1964
        %1966 = vrot.lane.b32.xlu0 %v1683, 125
        %v1967 = vpop.permute.xlu0 %1966
        %1968 = vrot.lane.b32.xlu0 %v1686, 125
        %v1969 = vpop.permute.xlu0 %1968
        %1970 = vrot.lane.b32.xlu0 %v1689, 125
        %v1971 = vpop.permute.xlu0 %1970
        %1972 = vrot.lane.b32.xlu0 %v1692, 125
        %v1973 = vpop.permute.xlu0 %1972
        %v1982 = vsel %vm1290, %v1959, 0.0
        %v1983 = vsel %vm1290, %v1961, 0.0
        %v1984 = vsel %vm1290, %v1963, 0.0
        %v1985 = vsel %vm1290, %v1965, 0.0
        %v1986 = vsel %vm1290, %v1967, 0.0
        %v1987 = vsel %vm1290, %v1969, 0.0
        %v1988 = vsel %vm1290, %v1971, 0.0
        %v1989 = vsel %vm1290, %v1973, 0.0
        %v1990 = vmul.f32 %v1301, %v1982
        %v1991 = vmul.f32 %v1305, %v1983
        %v1992 = vmul.f32 %v1309, %v1984
        %v1993 = vmul.f32 %v1313, %v1985
        %v1994 = vmul.f32 %v1317, %v1986
        %v1995 = vmul.f32 %v1321, %v1987
        %v1996 = vmul.f32 %v1325, %v1988
        %v1997 = vmul.f32 %v1329, %v1989
        %v1998 = vadd.f32 %v1950, %v1990
        %v1999 = vadd.f32 %v1951, %v1991
        %v2000 = vadd.f32 %v1952, %v1992
        %v2001 = vadd.f32 %v1953, %v1993
        %v2002 = vadd.f32 %v1954, %v1994
        %v2003 = vadd.f32 %v1955, %v1995
        %v2004 = vadd.f32 %v1956, %v1996
        %v2005 = vadd.f32 %v1957, %v1997
        %v2006 = vmul.f32 %v1998, 0.5
        %v2007 = vmul.f32 %v1999, 0.5
        %v2008 = vmul.f32 %v2000, 0.5
        %v2009 = vmul.f32 %v2001, 0.5
        %v2010 = vmul.f32 %v2002, 0.5
        %v2011 = vmul.f32 %v2003, 0.5
        %v2012 = vmul.f32 %v2004, 0.5
        %v2013 = vmul.f32 %v2005, 0.5
        %v2014 = vmul.f32 %v1651, %v2006
        %v2016 = vsel %vm1364, %v2014, 0
        %2018 = vmatpush.msra.mxu0 0.0
        %2019 = vmatpush.msra.mxu0 0.0
        %2020 = vmatpush.msra.mxu0 0.0
        %2021 = vmatpush.msra.mxu0 0.0
        %2022 = vmatpush.msra.mxu0 0.0
        %2023 = vmatpush.msra.mxu0 0.0
        %2024 = vmatpush.msra.mxu0 0.0
        %2025 = vmatpush.msra.mxu0 0.0
        %2026 = vmatpush.msra.mxu0 0.0
        %2027 = vmatpush.msra.mxu0 0.0
        %2028 = vmatpush.msra.mxu0 0.0
        %2029 = vmatpush.msra.mxu0 0.0
        %2030 = vmatpush.msra.mxu0 0.0
        %2031 = vmatpush.msra.mxu0 0.0
        %2032 = vmatpush.msra.mxu0 0.0
        %2033 = vmatpush.msra.mxu0 %v2016
        %2034 = vmatmul.f32.gmra.mxu0 %v1362
        %v2035 = vpop.f32.mrf.mxu0
        %v2036 = vadd.f32 %v1359, %v2035
        %2037 = vdwg.mxu0
        %v2039 = vrot.slane %v2006, 2
        %v2041 = vmul.f32 %v2036, %v2039
        %v2043 = vsel %vm1401, %v2041, 0
        %2045 = vmatpush.msra.mxu0 0.0
        %2046 = vmatpush.msra.mxu0 0.0
        %2047 = vmatpush.msra.mxu0 0.0
        %2048 = vmatpush.msra.mxu0 0.0
        %2049 = vmatpush.msra.mxu0 0.0
        %2050 = vmatpush.msra.mxu0 0.0
        %2051 = vmatpush.msra.mxu0 0.0
        %2052 = vmatpush.msra.mxu0 0.0
        %2053 = vmatpush.msra.mxu0 0.0
        %2054 = vmatpush.msra.mxu0 0.0
        %2055 = vmatpush.msra.mxu0 0.0
        %2056 = vmatpush.msra.mxu0 0.0
        %2057 = vmatpush.msra.mxu0 0.0
        %2058 = vmatpush.msra.mxu0 0.0
        %2059 = vmatpush.msra.mxu0 0.0
        %2060 = vmatpush.msra.mxu0 %v2043
        %2061 = vmatmul.f32.gmra.mxu0 %v1399
        %v2062 = vpop.f32.mrf.mxu0
        %v2063 = vadd.f32 %v1395, %v2062
        %2064 = vdwg.mxu0
        %v2066 = vrot.slane %v2006, 6
        %v2067 = vrot.slane %v2007, 6
        %v2068 = vsel %vm1364, %v2066, %v2067
        %v2070 = vmul.f32 %v2063, %v2068
        %2071 = vmatpush.msra.mxu0 0.0
        %2072 = vmatpush.msra.mxu0 0.0
        %2073 = vmatpush.msra.mxu0 0.0
        %2074 = vmatpush.msra.mxu0 0.0
        %2075 = vmatpush.msra.mxu0 0.0
        %2076 = vmatpush.msra.mxu0 0.0
        %2077 = vmatpush.msra.mxu0 0.0
        %2078 = vmatpush.msra.mxu0 0.0
        %2079 = vmatpush.msra.mxu0 0.0
        %2080 = vmatpush.msra.mxu0 0.0
        %2081 = vmatpush.msra.mxu0 0.0
        %2082 = vmatpush.msra.mxu0 0.0
        %2083 = vmatpush.msra.mxu0 0.0
        %2084 = vmatpush.msra.mxu0 0.0
        %2085 = vmatpush.msra.mxu0 0.0
        %2086 = vmatpush.msra.mxu0 %v2070
        %2087 = vmatmul.f32.gmra.mxu0 %v1443
        %v2088 = vpop.f32.mrf.mxu0
        %v2089 = vadd.f32 %v1434, %v2088
        %2090 = vmatmul.f32.gmra.mxu0 %v1446
        %v2091 = vpop.f32.mrf.mxu0
        %v2092 = vadd.f32 %v1439, %v2091
        %2093 = vdwg.mxu0
        %v2096 = vrot.slane %v2008, 6
        %v2097 = vsel %vm1364, %v2067, %v2096
        %v2098 = vrot.slane %v2009, 6
        %v2099 = vsel %vm1364, %v2096, %v2098
        %v2102 = vmul.f32 %v2089, %v2097
        %v2103 = vmul.f32 %v2092, %v2099
        %2104 = vmatpush.msra.mxu0 0.0
        %2105 = vmatpush.msra.mxu0 0.0
        %2106 = vmatpush.msra.mxu0 0.0
        %2107 = vmatpush.msra.mxu0 0.0
        %2108 = vmatpush.msra.mxu0 0.0
        %2109 = vmatpush.msra.mxu0 0.0
        %2110 = vmatpush.msra.mxu0 0.0
        %2111 = vmatpush.msra.mxu0 0.0
        %2112 = vmatpush.msra.mxu0 0.0
        %2113 = vmatpush.msra.mxu0 0.0
        %2114 = vmatpush.msra.mxu0 0.0
        %2115 = vmatpush.msra.mxu0 0.0
        %2116 = vmatpush.msra.mxu0 0.0
        %2117 = vmatpush.msra.mxu0 0.0
        %2118 = vmatpush.msra.mxu0 %v2103
        %2119 = vmatpush.msra.mxu0 %v2102
        %2120 = vmatmul.f32.gmra.mxu0 %v1503
        %v2121 = vpop.f32.mrf.mxu0
        %v2122 = vadd.f32 %v1484, %v2121
        %2123 = vmatmul.f32.gmra.mxu0 %v1506
        %v2124 = vpop.f32.mrf.mxu0
        %v2125 = vadd.f32 %v1489, %v2124
        %2126 = vmatmul.f32.gmra.mxu0 %v1509
        %v2127 = vpop.f32.mrf.mxu0
        %v2128 = vadd.f32 %v1494, %v2127
        %2129 = vmatmul.f32.gmra.mxu0 %v1512
        %v2130 = vpop.f32.mrf.mxu0
        %v2131 = vadd.f32 %v1499, %v2130
        %2132 = vdwg.mxu0
        %v2137 = vrot.slane %v2010, 6
        %v2138 = vsel %vm1364, %v2098, %v2137
        %v2139 = vrot.slane %v2011, 6
        %v2140 = vsel %vm1364, %v2137, %v2139
        %v2141 = vrot.slane %v2012, 6
        %v2142 = vsel %vm1364, %v2139, %v2141
        %v2143 = vrot.slane %v2013, 6
        %v2144 = vsel %vm1364, %v2141, %v2143
        %v2149 = vmul.f32 %v2122, %v2138
        %v2150 = vmul.f32 %v2125, %v2140
        %v2151 = vmul.f32 %v2128, %v2142
        %v2152 = vmul.f32 %v2131, %v2144
        %2153 = vmatpush.msra.mxu0 0.0
        %2154 = vmatpush.msra.mxu0 0.0
        %2155 = vmatpush.msra.mxu0 0.0
        %2156 = vmatpush.msra.mxu0 0.0
        %2157 = vmatpush.msra.mxu0 0.0
        %2158 = vmatpush.msra.mxu0 0.0
        %2159 = vmatpush.msra.mxu0 0.0
        %2160 = vmatpush.msra.mxu0 0.0
        %2161 = vmatpush.msra.mxu0 0.0
        %2162 = vmatpush.msra.mxu0 0.0
        %2163 = vmatpush.msra.mxu0 0.0
        %2164 = vmatpush.msra.mxu0 0.0
        %2165 = vmatpush.msra.mxu0 %v2152
        %2166 = vmatpush.msra.mxu0 %v2151
        %2167 = vmatpush.msra.mxu0 %v2150
        %2168 = vmatpush.msra.mxu0 %v2149
        %2169 = vmatmul.f32.gmra.mxu0 %v1584
        %v2170 = vpop.f32.mrf.mxu0
        %v2171 = vadd.f32 %v1566, %v2170
        %2172 = vmatmul.f32.gmra.mxu0 %v1587
        %v2173 = vpop.f32.mrf.mxu0
        %v2174 = vadd.f32 %v1571, %v2173
        %2175 = vmatmul.f32.gmra.mxu0 %v1590
        %v2176 = vpop.f32.mrf.mxu0
        %v2177 = vadd.f32 %v1576, %v2176
        %2178 = vmatmul.f32.gmra.mxu0 %v1593
        %v2179 = vpop.f32.mrf.mxu0
        %v2180 = vadd.f32 %v1581, %v2179
        %2181 = vdwg.mxu0
        %s2182 = scalar_lea.vmem %s544, 32 [#allocation2]
        %2183 = vst [vmem:[%s2182] sm:$0xff] %v2171
        %2184 = vst [vmem:[%s2182 + $0x8] sm:$0xff] %v2174
        %2185 = vst [vmem:[%s2182 + $0x10] sm:$0xff] %v2177
        %2186 = vst [vmem:[%s2182 + $0x18] sm:$0xff] %v2180
        %s2187 = sand.u32 %s401, 1
        %s2188 = scalar_lea.sflag [#allocation3], %s2187
        %s2189 = sand.u32 %s401, 1
        %s2190 = smul.addr %s2189, 64
        %s2191 = scalar_lea.vmem [#allocation2], %s2190
        // Predicated region
        $region89: #{tpu_custom_call.1} parent=87 // pred_check
          %p2192 = pneg %p411
        $region90: #{tpu_custom_call.1} parent=87 // pred_check_branch
          %2194 = sbr.rel (%p2192) target = $region92
        $region91: #{tpu_custom_call.1} parent=87 // pred_region
          %s2195 = smul.u32 2, %s31
          %2197 = vsyncadd %s2188, 0
          %s2198 = smul.addr %s2195, 4
          %s2199 = smul.addr %s2198, 8
          %s2200 = scalar_lea.hbm %s17, %s2199
          %s2201 = sshll.u32 %s2191, 4
          %s2202 = int_to_ptr.vmem [resolvable:$true] %s2201
          %s2203 = sshll.u32 %s2200, 4
          %s2204 = int_to_ptr.hbm [resolvable:$true] %s2203
          %2209 = dma.vmem_to_hbm [thread:$0]  %s2202, 1024, %s2204, %s2188, 128, 128, 8
        $region92: #{tpu_custom_call.1} parent=87 // pred_fallthru
          _
      $region88: #{tpu_custom_call.1} parent=5 // pred_fallthru
        _
      %p2210 = scmp.le.s32.totalorder 2, %s26
      // Predicated region
      $region93: #{tpu_custom_call.1} parent=5 // pred_check
        %p2211 = pneg %p2210
      $region94: #{tpu_custom_call.1} parent=5 // pred_check_branch
        %2213 = sbr.rel (%p2211) target = $region96
      $region95: #{tpu_custom_call.1} parent=5 // pred_region
        %s2214 = ssub.s32 %s26, 2
        // Predicated region
        $region97: #{tpu_custom_call.1} parent=95 // pred_check
          %p2215 = pneg %p417
        $region98: #{tpu_custom_call.1} parent=95 // pred_check_branch
          %2217 = sbr.rel (%p2215) target = $region100
        $region99: #{tpu_custom_call.1} parent=95 // pred_region
          %s2218 = sand.u32 %s402, 1
          %s2219 = scalar_lea.sflag [#allocation3], %s2218
          %s2220 = sand.u32 %s402, 1
          %s2221 = smul.addr %s2220, 64
          %s2222 = scalar_lea.vmem [#allocation2], %s2221
          %2224 = dma.done %s2219, 1024
        $region100: #{tpu_custom_call.1} parent=95 // pred_fallthru
          _
      $region96: #{tpu_custom_call.1} parent=5 // pred_fallthru
        _
    $region6: #{tpu_custom_call.1} parent=1 // loop_footer
      %s30 = sadd.s32 1, %s26
    $region7: #{tpu_custom_call.1} parent=1 // loop_footer_branch
      %25 = sbr.rel target = $region3
    $region8: #{tpu_custom_call.1} parent=1 // loop_exit
      _
    %2225 = vsyncpa [#allocation3], 1
    %s2226 = scalar_lea.sflag [#allocation3], 1
    %2227 = vsyncpa %s2226, 1

</llo_original>
